<compile_context>
chip_gen: v7x
topology: tpu7x:2x2x1
jax: 0.10.0
libtpu: 0.0.40
codegen_flags: <defaults>
</compile_context>

<pallas_src>
import functools

import jax
import jax.numpy as jnp
from jax import lax
from jax.experimental import pallas as pl
from jax.experimental.pallas import tpu as pltpu

_LANE = 128
_GEMM_DTYPE = jnp.bfloat16   # MXU operand dtype; accumulation / BN / add / ReLU stay f32
_TARGET_ROWS = 2048          # target M rows per grid step (MXU-aligned, few MiB of VMEM)
_MIN_GRID_STEPS = 2          # keep >=2 steps so double-buffering / v7x megacore have work


def _round_up(x, m):
    return (x + m - 1) // m * m


def _vmem_limit_bytes():
    # Per-generation scoped-VMEM cap: ~3/4 of physical (48 MiB on v7x, 96 MiB on v5e/v6e),
    # never above 100 MiB, leaving headroom for compiler-internal scratch.
    phys = 64 * 1024 * 1024
    try:
        phys = int(pltpu.get_tpu_info().vmem_capacity_bytes)
    except Exception:
        pass
    return min(phys * 3 // 4, 100 * 1024 * 1024)


def _compiler_params():
    return pltpu.CompilerParams(
        dimension_semantics=("parallel",),      # M/image tiles are independent (megacore)
        vmem_limit_bytes=_vmem_limit_bytes())


def _pick_group(n_images, rows_per_image, target_rows=_TARGET_ROWS,
                min_steps=_MIN_GRID_STEPS):
    """Images per grid step: largest divisor of n_images whose row tile fits `target_rows`
    while keeping at least `min_steps` grid steps (pipelining + v7x megacore)."""
    divisors = [g for g in range(1, n_images + 1) if n_images % g == 0]
    ok = [g for g in divisors if n_images // g >= min_steps]
    if not ok:
        return 1
    fit = [g for g in ok if g * rows_per_image <= target_rows]
    return max(fit) if fit else 1


# ----------------------------- Pallas kernels ---------------------------------------


def _conv1_kernel(p_ref, w_ref, b_ref, h_ref):
    """h = relu(patches @ w1_scaled + b1)   (conv1 + folded BN1 + ReLU, identity block)"""
    acc = jnp.dot(p_ref[...], w_ref[...], preferred_element_type=jnp.float32)
    h_ref[...] = jnp.maximum(acc + b_ref[...], 0.0).astype(h_ref.dtype)


def _conv1_downsample_kernel(p_ref, w_ref, b_ref, h_ref, res_ref, *, Cp):
    """Single 256-wide dot producing both paths:
         z   = patches @ [w1_scaled | wd_embedded] + [b1 | bd]
         h   = relu(z[:, :Cp])                     (conv1 + BN1 + ReLU)
         res = z[:, Cp:]                           (1x1 downsample + BN, kept in f32)
    """
    z = jnp.dot(p_ref[...], w_ref[...], preferred_element_type=jnp.float32) + b_ref[...]
    h_ref[...] = jnp.maximum(z[:, :Cp], 0.0).astype(h_ref.dtype)
    res_ref[...] = z[:, Cp:]


def _conv2_bn_add_relu_kernel(hp_ref, w2_ref, b2_ref, res_ref, out_ref, *, G, Ho, Wo, Cp):
    """Fused conv2 (3x3, stride 1, pad 1) + BN2 + residual add + ReLU.

    hp_ref holds G spatially zero-padded images of h in VMEM; the nine shifted tap
    windows are built on-chip (no HBM im2col round trip).
    """
    rows = G * Ho * Wo
    acc = jnp.zeros((rows, Cp), jnp.float32)
    for t in range(9):
        ky, kx = divmod(t, 3)
        win = hp_ref[:, ky:ky + Ho, kx:kx + Wo, :].reshape(rows, Cp)
        acc = acc + jnp.dot(win, w2_ref[t], preferred_element_type=jnp.float32)
    out = acc + b2_ref[...] + res_ref[...].reshape(rows, Cp)
    out_ref[...] = jnp.maximum(out, 0.0).reshape(G, Ho, Wo, Cp).astype(out_ref.dtype)


# ----------------------------- pallas_call wrappers ----------------------------------


def conv1_bn_relu(p, w, b, tm):
    m, k = p.shape
    cp = w.shape[1]
    cost = pl.CostEstimate(flops=int(2 * m * k * cp), transcendentals=0,
                           bytes_accessed=int(p.size * 2 + w.size * 2 + b.size * 4
                                              + m * cp * 2))
    return pl.pallas_call(
        _conv1_kernel,
        out_shape=jax.ShapeDtypeStruct((m, cp), _GEMM_DTYPE),
        grid=(m // tm,),
        in_specs=[pl.BlockSpec((tm, k), lambda i: (i, 0)),      # streaming patch tiles
                  pl.BlockSpec((k, cp), lambda i: (0, 0)),      # resident weights
                  pl.BlockSpec((1, cp), lambda i: (0, 0))],     # resident bias
        out_specs=pl.BlockSpec((tm, cp), lambda i: (i, 0)),
        compiler_params=_compiler_params(),
        cost_estimate=cost,
    )(p, w, b)


def conv1_bn_relu_downsample(p, wcat, bcat, tm, cp):
    m, k = p.shape
    ncols = wcat.shape[1]                                       # 2 * cp (256-wide MXU N)
    kernel = functools.partial(_conv1_downsample_kernel, Cp=cp)
    cost = pl.CostEstimate(flops=int(2 * m * k * ncols), transcendentals=0,
                           bytes_accessed=int(p.size * 2 + wcat.size * 2 + bcat.size * 4
                                              + m * cp * 2 + m * cp * 4))
    return pl.pallas_call(
        kernel,
        out_shape=(jax.ShapeDtypeStruct((m, cp), _GEMM_DTYPE),   # h (bf16)
                   jax.ShapeDtypeStruct((m, cp), jnp.float32)),  # residual (f32)
        grid=(m // tm,),
        in_specs=[pl.BlockSpec((tm, k), lambda i: (i, 0)),
                  pl.BlockSpec((k, ncols), lambda i: (0, 0)),
                  pl.BlockSpec((1, ncols), lambda i: (0, 0))],
        out_specs=(pl.BlockSpec((tm, cp), lambda i: (i, 0)),
                   pl.BlockSpec((tm, cp), lambda i: (i, 0))),
        compiler_params=_compiler_params(),
        cost_estimate=cost,
    )(p, wcat, bcat)


def conv2_bn_add_relu(h_pad, w2, b2, res, g, Ho, Wo, cp):
    n = h_pad.shape[0]
    Hp, Wp = Ho + 2, Wo + 2
    kernel = functools.partial(_conv2_bn_add_relu_kernel, G=g, Ho=Ho, Wo=Wo, Cp=cp)
    out_elems = n * Ho * Wo * cp
    cost = pl.CostEstimate(flops=int(2 * n * Ho * Wo * 9 * cp * cp), transcendentals=0,
                           bytes_accessed=int(h_pad.size * 2 + w2.size * 2 + b2.size * 4
                                              + res.size * 4 + out_elems * 2))
    return pl.pallas_call(
        kernel,
        out_shape=jax.ShapeDtypeStruct((n, Ho, Wo, cp), _GEMM_DTYPE),
        grid=(n // g,),
        in_specs=[pl.BlockSpec((g, Hp, Wp, cp), lambda i: (i, 0, 0, 0)),  # padded h images
                  pl.BlockSpec((9, cp, cp), lambda i: (0, 0, 0)),         # resident per-tap w2
                  pl.BlockSpec((1, cp), lambda i: (0, 0)),                # resident bias
                  pl.BlockSpec((g, Ho, Wo, cp), lambda i: (i, 0, 0, 0))], # residual (f32)
        out_specs=pl.BlockSpec((g, Ho, Wo, cp), lambda i: (i, 0, 0, 0)),
        compiler_params=_compiler_params(),
        cost_estimate=cost,
    )(h_pad, w2, b2, res)


# ----------------------------- JAX glue (layout only) -------------------------------


def im2col(x_nhwc, ksize, stride, pad):
    x = jnp.pad(x_nhwc, ((0, 0), (pad, pad), (pad, pad), (0, 0)))
    N, Hp, Wp, C = x.shape
    Ho = (Hp - ksize) // stride + 1
    Wo = (Wp - ksize) // stride + 1
    cols = []
    for ky in range(ksize):
        for kx in range(ksize):
            cols.append(
                x[:, ky:ky + stride * (Ho - 1) + 1:stride,
                     kx:kx + stride * (Wo - 1) + 1:stride, :])
    patches = jnp.concatenate(cols, axis=-1)  # (N, Ho, Wo, k*k*C), (ky, kx, cin) order
    return patches.reshape(N * Ho * Wo, ksize * ksize * C), (N, Ho, Wo)


def oihw_to_mat(w_oihw):
    # PyTorch (Cout, Cin, Kh, Kw) -> (Kh*Kw*Cin, Cout), matching im2col (ky, kx, cin) order.
    return jnp.transpose(w_oihw, (2, 3, 1, 0)).reshape(-1, w_oihw.shape[0])


def bn_affine(gamma, beta, mean, var, eps=1e-5):
    scale = gamma / jnp.sqrt(var + eps)
    bias = beta - mean * scale
    return scale.reshape(1, -1), bias.reshape(1, -1)


def residual_block_forward(x_nchw, params, stride):
    cout = params["w1"].shape[0]
    cin = params["w1"].shape[1]
    cp = _round_up(cout, _LANE)                 # lane-dense output channels

    x = jnp.transpose(x_nchw, (0, 2, 3, 1))     # NCHW -> NHWC (once, at the block boundary)

    # --- conv1 (+ fused downsample): im2col GEMM, K padded to a lane multiple -------
    p1, (N, Ho, Wo) = im2col(x, 3, stride, 1)
    M = N * Ho * Wo
    k1 = 9 * cin
    k1p = _round_up(k1, _LANE)
    p1 = jnp.pad(p1, ((0, 0), (0, k1p - k1))).astype(_GEMM_DTYPE)

    rows_per_img = Ho * Wo
    g1 = _pick_group(N, rows_per_img)
    tm = g1 * rows_per_img                      # whole-image row tiles -> m_pad == M

    s1, b1 = bn_affine(*params["bn1"])
    w1 = jnp.pad(oihw_to_mat(params["w1"]) * s1, ((0, k1p - k1), (0, cp - cout)))
    b1 = jnp.pad(b1, ((0, 0), (0, cp - cout)))

    if "wd" in params:
        # 1x1 stride-s downsample + BN: its input pixels are exactly the centre tap of the
        # 3x3 patches, so embed the compact (cin, cout) weight there and CONCAT it with w1
        # along output channels -> one 256-wide dot covers both paths.
        sd, bd = bn_affine(*params["bnd"])
        wd_1x1 = oihw_to_mat(params["wd"]) * sd                         # (cin, cout)
        wd = jnp.zeros((k1p, cp), jnp.float32).at[4 * cin:5 * cin, :cout].set(wd_1x1)
        wcat = jnp.concatenate([w1, wd], axis=1).astype(_GEMM_DTYPE)    # (k1p, 2*cp)
        bcat = jnp.concatenate([b1, jnp.pad(bd, ((0, 0), (0, cp - cout)))], axis=1)
        h2d, res2d = conv1_bn_relu_downsample(p1, wcat, bcat, tm, cp)
        res4 = res2d.reshape(N, Ho, Wo, cp)                             # f32, free reshape
    else:
        assert stride == 1 and cin == cout, (
            "identity residual path requires stride == 1 and in_channels == out_channels")
        h2d = conv1_bn_relu(p1, w1.astype(_GEMM_DTYPE), b1, tm)
        res4 = jnp.pad(x, ((0, 0), (0, 0), (0, 0), (0, cp - cout)))     # identity, kept f32

    # --- conv2 + BN2 + add + ReLU: taps built in-kernel from spatially padded h ------
    h4 = h2d.reshape(N, Ho, Wo, cp)                                     # free (tm | M)
    h_pad = jnp.pad(h4, ((0, 0), (1, 1), (1, 1), (0, 0)))               # ~1.5x copy, not 9x

    s2, b2 = bn_affine(*params["bn2"])
    w2 = jnp.pad((oihw_to_mat(params["w2"]) * s2).reshape(9, cout, cout),
                 ((0, 0), (0, cp - cout), (0, cp - cout))).astype(_GEMM_DTYPE)
    b2 = jnp.pad(b2, ((0, 0), (0, cp - cout)))

    g2 = _pick_group(N, rows_per_img)
    out4 = conv2_bn_add_relu(h_pad, w2, b2, res4, g2, Ho, Wo, cp)       # (N,Ho,Wo,cp) bf16

    # bf16 kernel writeback; the f32 cast fuses into the final transpose back to NCHW.
    return jnp.transpose(out4[..., :cout].astype(jnp.float32), (0, 3, 1, 2))


# ----------------------------- params & reference -----------------------------------


def init_params(key, in_channels, out_channels, stride):
    keys = iter(jax.random.split(key, 8))

    def conv_w(k, co, ci, kh, kw):
        bound = 1.0 / (ci * kh * kw) ** 0.5
        return jax.random.uniform(k, (co, ci, kh, kw), jnp.float32, -bound, bound)

    def bn_p(k, c):
        k1, k2, k3, k4 = jax.random.split(k, 4)
        gamma = jax.random.uniform(k1, (c,), jnp.float32, 0.5, 1.5)
        beta = 0.1 * jax.random.normal(k2, (c,), jnp.float32)
        mean = 0.1 * jax.random.normal(k3, (c,), jnp.float32)
        var = jax.random.uniform(k4, (c,), jnp.float32, 0.5, 1.5)
        return (gamma, beta, mean, var)

    params = {
        "w1": conv_w(next(keys), out_channels, in_channels, 3, 3),
        "bn1": bn_p(next(keys), out_channels),
        "w2": conv_w(next(keys), out_channels, out_channels, 3, 3),
        "bn2": bn_p(next(keys), out_channels),
    }
    if stride != 1 or in_channels != out_channels:
        params["wd"] = conv_w(next(keys), out_channels, in_channels, 1, 1)
        params["bnd"] = bn_p(next(keys), out_channels)
    return params


def _conv_ref(x, w, stride, pad):
    return lax.conv_general_dilated(
        x, w, window_strides=(stride, stride),
        padding=((pad, pad), (pad, pad)),
        dimension_numbers=("NCHW", "OIHW", "NCHW"))


def _bn_ref(x, p, eps=1e-5):
    g, b, m, v = p
    return (g[None, :, None, None] * (x - m[None, :, None, None])
            / jnp.sqrt(v[None, :, None, None] + eps) + b[None, :, None, None])


def residual_block_ref(x, params, stride):
    out = jax.nn.relu(_bn_ref(_conv_ref(x, params["w1"], stride, 1), params["bn1"]))
    out = _bn_ref(_conv_ref(out, params["w2"], 1, 1), params["bn2"])
    if "wd" in params:
        res = _bn_ref(_conv_ref(x, params["wd"], stride, 0), params["bnd"])
    else:
        res = x
    return jax.nn.relu(out + res)


# ----------------------------- main --------------------------------------------------

if __name__ == "__main__":
    key = jax.random.PRNGKey(0)
    k_x, k_p, k_x2, k_p2 = jax.random.split(key, 4)

    fwd = jax.jit(residual_block_forward, static_argnums=2)

    # --- downsample path: stride 2, channel change (1x1 conv + BN on the skip) -------
    N, Cin, H, W = 2, 4, 16, 16
    Cout, stride = 8, 2
    x = jax.random.normal(k_x, (N, Cin, H, W), jnp.float32)
    params = init_params(k_p, Cin, Cout, stride)
    out = jax.block_until_ready(fwd(x, params, stride))
    ref = residual_block_ref(x, params, stride)
    assert out.shape == ref.shape == (N, Cout, H // stride, W // stride), (out.shape, ref.shape)
    err = float(jnp.max(jnp.abs(out - ref)))
    # bf16 MXU operands / bf16 writeback with f32 accumulation -> loose comparison.
    assert jnp.allclose(out, ref, atol=5e-2, rtol=5e-2), f"downsample max abs err {err}"

    # --- identity path: stride 1, same channels --------------------------------------
    C2 = 8
    x2 = jax.random.normal(k_x2, (N, C2, H, W), jnp.float32)
    params2 = init_params(k_p2, C2, C2, 1)
    out2 = jax.block_until_ready(fwd(x2, params2, 1))
    ref2 = residual_block_ref(x2, params2, 1)
    assert out2.shape == ref2.shape == (N, C2, H, W), (out2.shape, ref2.shape)
    err2 = float(jnp.max(jnp.abs(out2 - ref2)))
    assert jnp.allclose(out2, ref2, atol=5e-2, rtol=5e-2), f"identity max abs err {err2}"

    print("KERNEL_OK")
</pallas_src>

<mosaic_0001>
module attributes {stable_mosaic.version = 11 : i64} {
  func.func @_conv1_downsample_kernel(%arg0: i32, %arg1: memref<64x128xbf16, #tpu.memory_space<vmem>>, %arg2: memref<128x256xbf16, #tpu.memory_space<vmem>>, %arg3: memref<1x256xf32, #tpu.memory_space<vmem>>, %arg4: memref<64x128xbf16, #tpu.memory_space<vmem>>, %arg5: memref<64x128xf32, #tpu.memory_space<vmem>>) attributes {dimension_semantics = [#tpu.dimension_semantics<parallel>], iteration_bounds = array<i64: 2>, scalar_prefetch = 0 : i64, scratch_operands = 0 : i64, tpu.core_type = #tpu.core_type<tc>, window_params = [{transform_indices = @transform_0, window_bounds = array<i64: 64, 128>}, {pipeline_mode = #tpu.pipeline_mode<synchronous>, transform_indices = @transform_1, window_bounds = array<i64: 128, 256>}, {pipeline_mode = #tpu.pipeline_mode<synchronous>, transform_indices = @transform_2, window_bounds = array<i64: 1, 256>}, {transform_indices = @transform_3, window_bounds = array<i64: 64, 128>}, {transform_indices = @transform_4, window_bounds = array<i64: 64, 128>}]} {
    %c0 = arith.constant 0 : index
    %c0_0 = arith.constant 0 : index
    %0 = vector.load %arg1[%c0, %c0_0] : memref<64x128xbf16, #tpu.memory_space<vmem>>, vector<64x128xbf16>
    %c0_1 = arith.constant 0 : index
    %c0_2 = arith.constant 0 : index
    %1 = vector.load %arg2[%c0_1, %c0_2] : memref<128x256xbf16, #tpu.memory_space<vmem>>, vector<128x256xbf16>
    %cst = arith.constant dense<0.000000e+00> : vector<64x256xf32>
    %2 = tpu.matmul %0, %1, %cst {dimension_numbers = #tpu.dot_dimension_numbers<[1], [0], [0], [1], [0, 0, 1, 1], [], []>} : vector<64x128xbf16>, vector<128x256xbf16>, vector<64x256xf32> -> vector<64x256xf32>
    %c0_3 = arith.constant 0 : index
    %c0_4 = arith.constant 0 : index
    %3 = vector.load %arg3[%c0_3, %c0_4] : memref<1x256xf32, #tpu.memory_space<vmem>>, vector<1x256xf32>
    %4 = vector.broadcast %3 : vector<1x256xf32> to vector<64x256xf32>
    %5 = arith.addf %2, %4 : vector<64x256xf32>
    %6 = vector.extract_strided_slice %5 {offsets = [0, 0], sizes = [64, 128], strides = [1, 1]} : vector<64x256xf32> to vector<64x128xf32>
    %cst_5 = arith.constant 0.000000e+00 : f32
    %7 = vector.broadcast %cst_5 : f32 to vector<64x128xf32>
    %8 = arith.maximumf %6, %7 : vector<64x128xf32>
    %9 = arith.truncf %8 : vector<64x128xf32> to vector<64x128xbf16>
    %c0_6 = arith.constant 0 : index
    %c0_7 = arith.constant 0 : index
    %10 = vector.load %arg4[%c0_6, %c0_7] : memref<64x128xbf16, #tpu.memory_space<vmem>>, vector<64x128xbf16>
    tpu.vector_store %arg4[%c0_6, %c0_7], %9 {strides = array<i32>} : memref<64x128xbf16, #tpu.memory_space<vmem>>, vector<64x128xbf16>,
    %11 = vector.extract_strided_slice %5 {offsets = [0, 128], sizes = [64, 128], strides = [1, 1]} : vector<64x256xf32> to vector<64x128xf32>
    %c0_8 = arith.constant 0 : index
    %c0_9 = arith.constant 0 : index
    %12 = vector.load %arg5[%c0_8, %c0_9] : memref<64x128xf32, #tpu.memory_space<vmem>>, vector<64x128xf32>
    tpu.vector_store %arg5[%c0_8, %c0_9], %11 {strides = array<i32>} : memref<64x128xf32, #tpu.memory_space<vmem>>, vector<64x128xf32>,
    return
  }
  func.func @transform_0(%arg0: i32) -> (i32, i32) {
    %c0_i32 = arith.constant 0 : i32
    %c0_i32_0 = arith.constant 0 : i32
    return %arg0, %c0_i32 : i32, i32
  }
  func.func @transform_1(%arg0: i32) -> (i32, i32) {
    %c0_i32 = arith.constant 0 : i32
    %c0_i32_0 = arith.constant 0 : i32
    %c0_i32_1 = arith.constant 0 : i32
    return %c0_i32, %c0_i32_0 : i32, i32
  }
  func.func @transform_2(%arg0: i32) -> (i32, i32) {
    %c0_i32 = arith.constant 0 : i32
    %c0_i32_0 = arith.constant 0 : i32
    %c0_i32_1 = arith.constant 0 : i32
    return %c0_i32, %c0_i32_0 : i32, i32
  }
  func.func @transform_3(%arg0: i32) -> (i32, i32) {
    %c0_i32 = arith.constant 0 : i32
    %c0_i32_0 = arith.constant 0 : i32
    return %arg0, %c0_i32 : i32, i32
  }
  func.func @transform_4(%arg0: i32) -> (i32, i32) {
    %c0_i32 = arith.constant 0 : i32
    %c0_i32_0 = arith.constant 0 : i32
    return %arg0, %c0_i32 : i32, i32
  }
}

module attributes {stable_mosaic.version = 11 : i64} {
  func.func @_conv2_bn_add_relu_kernel(%arg0: i32, %arg1: memref<1x10x10x128xbf16, #tpu.memory_space<vmem>>, %arg2: memref<9x128x128xbf16, #tpu.memory_space<vmem>>, %arg3: memref<1x128xf32, #tpu.memory_space<vmem>>, %arg4: memref<1x8x8x128xf32, #tpu.memory_space<vmem>>, %arg5: memref<1x8x8x128xbf16, #tpu.memory_space<vmem>>) attributes {dimension_semantics = [#tpu.dimension_semantics<parallel>], iteration_bounds = array<i64: 2>, scalar_prefetch = 0 : i64, scratch_operands = 0 : i64, tpu.core_type = #tpu.core_type<tc>, window_params = [{transform_indices = @transform_0, window_bounds = array<i64: 1, 10, 10, 128>}, {pipeline_mode = #tpu.pipeline_mode<synchronous>, transform_indices = @transform_1, window_bounds = array<i64: 9, 128, 128>}, {pipeline_mode = #tpu.pipeline_mode<synchronous>, transform_indices = @transform_2, window_bounds = array<i64: 1, 128>}, {transform_indices = @transform_3, window_bounds = array<i64: 1, 8, 8, 128>}, {transform_indices = @transform_4, window_bounds = array<i64: 1, 8, 8, 128>}]} {
    %cst = arith.constant 0.000000e+00 : f32
    %0 = vector.broadcast %cst : f32 to vector<64x128xf32>
    %c0 = arith.constant 0 : index
    %c0_0 = arith.constant 0 : index
    %c0_1 = arith.constant 0 : index
    %c0_2 = arith.constant 0 : index
    %1 = vector.load %arg1[%c0, %c0_0, %c0_1, %c0_2] : memref<1x10x10x128xbf16, #tpu.memory_space<vmem>>, vector<1x8x8x128xbf16>
    %2 = vector.shape_cast %1 : vector<1x8x8x128xbf16> to vector<64x128xbf16>
    %c0_3 = arith.constant 0 : index
    %c0_4 = arith.constant 0 : index
    %c0_5 = arith.constant 0 : index
    %3 = vector.load %arg2[%c0_3, %c0_4, %c0_5] : memref<9x128x128xbf16, #tpu.memory_space<vmem>>, vector<1x128x128xbf16>
    %4 = vector.shape_cast %3 : vector<1x128x128xbf16> to vector<128x128xbf16>
    %cst_6 = arith.constant dense<0.000000e+00> : vector<64x128xf32>
    %5 = tpu.matmul %2, %4, %cst_6 {dimension_numbers = #tpu.dot_dimension_numbers<[1], [0], [0], [1], [0, 0, 1, 1], [], []>} : vector<64x128xbf16>, vector<128x128xbf16>, vector<64x128xf32> -> vector<64x128xf32>
    %6 = arith.addf %0, %5 : vector<64x128xf32>
    %c0_7 = arith.constant 0 : index
    %c0_8 = arith.constant 0 : index
    %c1 = arith.constant 1 : index
    %c0_9 = arith.constant 0 : index
    %7 = vector.load %arg1[%c0_7, %c0_8, %c1, %c0_9] : memref<1x10x10x128xbf16, #tpu.memory_space<vmem>>, vector<1x8x8x128xbf16>
    %8 = vector.shape_cast %7 : vector<1x8x8x128xbf16> to vector<64x128xbf16>
    %c1_10 = arith.constant 1 : index
    %c0_11 = arith.constant 0 : index
    %c0_12 = arith.constant 0 : index
    %9 = vector.load %arg2[%c1_10, %c0_11, %c0_12] : memref<9x128x128xbf16, #tpu.memory_space<vmem>>, vector<1x128x128xbf16>
    %10 = vector.shape_cast %9 : vector<1x128x128xbf16> to vector<128x128xbf16>
    %cst_13 = arith.constant dense<0.000000e+00> : vector<64x128xf32>
    %11 = tpu.matmul %8, %10, %cst_13 {dimension_numbers = #tpu.dot_dimension_numbers<[1], [0], [0], [1], [0, 0, 1, 1], [], []>} : vector<64x128xbf16>, vector<128x128xbf16>, vector<64x128xf32> -> vector<64x128xf32>
    %12 = arith.addf %6, %11 : vector<64x128xf32>
    %c0_14 = arith.constant 0 : index
    %c0_15 = arith.constant 0 : index
    %c2 = arith.constant 2 : index
    %c0_16 = arith.constant 0 : index
    %13 = vector.load %arg1[%c0_14, %c0_15, %c2, %c0_16] : memref<1x10x10x128xbf16, #tpu.memory_space<vmem>>, vector<1x8x8x128xbf16>
    %14 = vector.shape_cast %13 : vector<1x8x8x128xbf16> to vector<64x128xbf16>
    %c2_17 = arith.constant 2 : index
    %c0_18 = arith.constant 0 : index
    %c0_19 = arith.constant 0 : index
    %15 = vector.load %arg2[%c2_17, %c0_18, %c0_19] : memref<9x128x128xbf16, #tpu.memory_space<vmem>>, vector<1x128x128xbf16>
    %16 = vector.shape_cast %15 : vector<1x128x128xbf16> to vector<128x128xbf16>
    %cst_20 = arith.constant dense<0.000000e+00> : vector<64x128xf32>
    %17 = tpu.matmul %14, %16, %cst_20 {dimension_numbers = #tpu.dot_dimension_numbers<[1], [0], [0], [1], [0, 0, 1, 1], [], []>} : vector<64x128xbf16>, vector<128x128xbf16>, vector<64x128xf32> -> vector<64x128xf32>
    %18 = arith.addf %12, %17 : vector<64x128xf32>
    %c0_21 = arith.constant 0 : index
    %c1_22 = arith.constant 1 : index
    %c0_23 = arith.constant 0 : index
    %c0_24 = arith.constant 0 : index
    %19 = vector.load %arg1[%c0_21, %c1_22, %c0_23, %c0_24] : memref<1x10x10x128xbf16, #tpu.memory_space<vmem>>, vector<1x8x8x128xbf16>
    %20 = vector.shape_cast %19 : vector<1x8x8x128xbf16> to vector<64x128xbf16>
    %c3 = arith.constant 3 : index
    %c0_25 = arith.constant 0 : index
    %c0_26 = arith.constant 0 : index
    %21 = vector.load %arg2[%c3, %c0_25, %c0_26] : memref<9x128x128xbf16, #tpu.memory_space<vmem>>, vector<1x128x128xbf16>
    %22 = vector.shape_cast %21 : vector<1x128x128xbf16> to vector<128x128xbf16>
    %cst_27 = arith.constant dense<0.000000e+00> : vector<64x128xf32>
    %23 = tpu.matmul %20, %22, %cst_27 {dimension_numbers = #tpu.dot_dimension_numbers<[1], [0], [0], [1], [0, 0, 1, 1], [], []>} : vector<64x128xbf16>, vector<128x128xbf16>, vector<64x128xf32> -> vector<64x128xf32>
    %24 = arith.addf %18, %23 : vector<64x128xf32>
    %c0_28 = arith.constant 0 : index
    %c1_29 = arith.constant 1 : index
    %c1_30 = arith.constant 1 : index
    %c0_31 = arith.constant 0 : index
    %25 = vector.load %arg1[%c0_28, %c1_29, %c1_30, %c0_31] : memref<1x10x10x128xbf16, #tpu.memory_space<vmem>>, vector<1x8x8x128xbf16>
    %26 = vector.shape_cast %25 : vector<1x8x8x128xbf16> to vector<64x128xbf16>
    %c4 = arith.constant 4 : index
    %c0_32 = arith.constant 0 : index
    %c0_33 = arith.constant 0 : index
    %27 = vector.load %arg2[%c4, %c0_32, %c0_33] : memref<9x128x128xbf16, #tpu.memory_space<vmem>>, vector<1x128x128xbf16>
    %28 = vector.shape_cast %27 : vector<1x128x128xbf16> to vector<128x128xbf16>
    %cst_34 = arith.constant dense<0.000000e+00> : vector<64x128xf32>
    %29 = tpu.matmul %26, %28, %cst_34 {dimension_numbers = #tpu.dot_dimension_numbers<[1], [0], [0], [1], [0, 0, 1, 1], [], []>} : vector<64x128xbf16>, vector<128x128xbf16>, vector<64x128xf32> -> vector<64x128xf32>
    %30 = arith.addf %24, %29 : vector<64x128xf32>
    %c0_35 = arith.constant 0 : index
    %c1_36 = arith.constant 1 : index
    %c2_37 = arith.constant 2 : index
    %c0_38 = arith.constant 0 : index
    %31 = vector.load %arg1[%c0_35, %c1_36, %c2_37, %c0_38] : memref<1x10x10x128xbf16, #tpu.memory_space<vmem>>, vector<1x8x8x128xbf16>
    %32 = vector.shape_cast %31 : vector<1x8x8x128xbf16> to vector<64x128xbf16>
    %c5 = arith.constant 5 : index
    %c0_39 = arith.constant 0 : index
    %c0_40 = arith.constant 0 : index
    %33 = vector.load %arg2[%c5, %c0_39, %c0_40] : memref<9x128x128xbf16, #tpu.memory_space<vmem>>, vector<1x128x128xbf16>
    %34 = vector.shape_cast %33 : vector<1x128x128xbf16> to vector<128x128xbf16>
    %cst_41 = arith.constant dense<0.000000e+00> : vector<64x128xf32>
    %35 = tpu.matmul %32, %34, %cst_41 {dimension_numbers = #tpu.dot_dimension_numbers<[1], [0], [0], [1], [0, 0, 1, 1], [], []>} : vector<64x128xbf16>, vector<128x128xbf16>, vector<64x128xf32> -> vector<64x128xf32>
    %36 = arith.addf %30, %35 : vector<64x128xf32>
    %c0_42 = arith.constant 0 : index
    %c2_43 = arith.constant 2 : index
    %c0_44 = arith.constant 0 : index
    %c0_45 = arith.constant 0 : index
    %37 = vector.load %arg1[%c0_42, %c2_43, %c0_44, %c0_45] : memref<1x10x10x128xbf16, #tpu.memory_space<vmem>>, vector<1x8x8x128xbf16>
    %38 = vector.shape_cast %37 : vector<1x8x8x128xbf16> to vector<64x128xbf16>
    %c6 = arith.constant 6 : index
    %c0_46 = arith.constant 0 : index
    %c0_47 = arith.constant 0 : index
    %39 = vector.load %arg2[%c6, %c0_46, %c0_47] : memref<9x128x128xbf16, #tpu.memory_space<vmem>>, vector<1x128x128xbf16>
    %40 = vector.shape_cast %39 : vector<1x128x128xbf16> to vector<128x128xbf16>
    %cst_48 = arith.constant dense<0.000000e+00> : vector<64x128xf32>
    %41 = tpu.matmul %38, %40, %cst_48 {dimension_numbers = #tpu.dot_dimension_numbers<[1], [0], [0], [1], [0, 0, 1, 1], [], []>} : vector<64x128xbf16>, vector<128x128xbf16>, vector<64x128xf32> -> vector<64x128xf32>
    %42 = arith.addf %36, %41 : vector<64x128xf32>
    %c0_49 = arith.constant 0 : index
    %c2_50 = arith.constant 2 : index
    %c1_51 = arith.constant 1 : index
    %c0_52 = arith.constant 0 : index
    %43 = vector.load %arg1[%c0_49, %c2_50, %c1_51, %c0_52] : memref<1x10x10x128xbf16, #tpu.memory_space<vmem>>, vector<1x8x8x128xbf16>
    %44 = vector.shape_cast %43 : vector<1x8x8x128xbf16> to vector<64x128xbf16>
    %c7 = arith.constant 7 : index
    %c0_53 = arith.constant 0 : index
    %c0_54 = arith.constant 0 : index
    %45 = vector.load %arg2[%c7, %c0_53, %c0_54] : memref<9x128x128xbf16, #tpu.memory_space<vmem>>, vector<1x128x128xbf16>
    %46 = vector.shape_cast %45 : vector<1x128x128xbf16> to vector<128x128xbf16>
    %cst_55 = arith.constant dense<0.000000e+00> : vector<64x128xf32>
    %47 = tpu.matmul %44, %46, %cst_55 {dimension_numbers = #tpu.dot_dimension_numbers<[1], [0], [0], [1], [0, 0, 1, 1], [], []>} : vector<64x128xbf16>, vector<128x128xbf16>, vector<64x128xf32> -> vector<64x128xf32>
    %48 = arith.addf %42, %47 : vector<64x128xf32>
    %c0_56 = arith.constant 0 : index
    %c2_57 = arith.constant 2 : index
    %c2_58 = arith.constant 2 : index
    %c0_59 = arith.constant 0 : index
    %49 = vector.load %arg1[%c0_56, %c2_57, %c2_58, %c0_59] : memref<1x10x10x128xbf16, #tpu.memory_space<vmem>>, vector<1x8x8x128xbf16>
    %50 = vector.shape_cast %49 : vector<1x8x8x128xbf16> to vector<64x128xbf16>
    %c8 = arith.constant 8 : index
    %c0_60 = arith.constant 0 : index
    %c0_61 = arith.constant 0 : index
    %51 = vector.load %arg2[%c8, %c0_60, %c0_61] : memref<9x128x128xbf16, #tpu.memory_space<vmem>>, vector<1x128x128xbf16>
    %52 = vector.shape_cast %51 : vector<1x128x128xbf16> to vector<128x128xbf16>
    %cst_62 = arith.constant dense<0.000000e+00> : vector<64x128xf32>
    %53 = tpu.matmul %50, %52, %cst_62 {dimension_numbers = #tpu.dot_dimension_numbers<[1], [0], [0], [1], [0, 0, 1, 1], [], []>} : vector<64x128xbf16>, vector<128x128xbf16>, vector<64x128xf32> -> vector<64x128xf32>
    %54 = arith.addf %48, %53 : vector<64x128xf32>
    %c0_63 = arith.constant 0 : index
    %c0_64 = arith.constant 0 : index
    %55 = vector.load %arg3[%c0_63, %c0_64] : memref<1x128xf32, #tpu.memory_space<vmem>>, vector<1x128xf32>
    %56 = vector.broadcast %55 : vector<1x128xf32> to vector<64x128xf32>
    %57 = arith.addf %54, %56 : vector<64x128xf32>
    %c0_65 = arith.constant 0 : index
    %c0_66 = arith.constant 0 : index
    %c0_67 = arith.constant 0 : index
    %c0_68 = arith.constant 0 : index
    %58 = vector.load %arg4[%c0_65, %c0_66, %c0_67, %c0_68] : memref<1x8x8x128xf32, #tpu.memory_space<vmem>>, vector<1x8x8x128xf32>
    %59 = vector.shape_cast %58 : vector<1x8x8x128xf32> to vector<64x128xf32>
    %60 = arith.addf %57, %59 : vector<64x128xf32>
    %cst_69 = arith.constant 0.000000e+00 : f32
    %61 = vector.broadcast %cst_69 : f32 to vector<64x128xf32>
    %62 = arith.maximumf %60, %61 : vector<64x128xf32>
    %63 = vector.shape_cast %62 : vector<64x128xf32> to vector<1x8x8x128xf32>
    %64 = arith.truncf %63 : vector<1x8x8x128xf32> to vector<1x8x8x128xbf16>
    %c0_70 = arith.constant 0 : index
    %c0_71 = arith.constant 0 : index
    %c0_72 = arith.constant 0 : index
    %c0_73 = arith.constant 0 : index
    %65 = vector.load %arg5[%c0_70, %c0_71, %c0_72, %c0_73] : memref<1x8x8x128xbf16, #tpu.memory_space<vmem>>, vector<1x8x8x128xbf16>
    tpu.vector_store %arg5[%c0_70, %c0_71, %c0_72, %c0_73], %64 {strides = array<i32>} : memref<1x8x8x128xbf16, #tpu.memory_space<vmem>>, vector<1x8x8x128xbf16>,
    return
  }
  func.func @transform_0(%arg0: i32) -> (i32, i32, i32, i32) {
    %c0_i32 = arith.constant 0 : i32
    %c0_i32_0 = arith.constant 0 : i32
    %c0_i32_1 = arith.constant 0 : i32
    %c0_i32_2 = arith.constant 0 : i32
    return %arg0, %c0_i32, %c0_i32_0, %c0_i32_1 : i32, i32, i32, i32
  }
  func.func @transform_1(%arg0: i32) -> (i32, i32, i32) {
    %c0_i32 = arith.constant 0 : i32
    %c0_i32_0 = arith.constant 0 : i32
    %c0_i32_1 = arith.constant 0 : i32
    %c0_i32_2 = arith.constant 0 : i32
    return %c0_i32, %c0_i32_0, %c0_i32_1 : i32, i32, i32
  }
  func.func @transform_2(%arg0: i32) -> (i32, i32) {
    %c0_i32 = arith.constant 0 : i32
    %c0_i32_0 = arith.constant 0 : i32
    %c0_i32_1 = arith.constant 0 : i32
    return %c0_i32, %c0_i32_0 : i32, i32
  }
  func.func @transform_3(%arg0: i32) -> (i32, i32, i32, i32) {
    %c0_i32 = arith.constant 0 : i32
    %c0_i32_0 = arith.constant 0 : i32
    %c0_i32_1 = arith.constant 0 : i32
    %c0_i32_2 = arith.constant 0 : i32
    return %arg0, %c0_i32, %c0_i32_0, %c0_i32_1 : i32, i32, i32, i32
  }
  func.func @transform_4(%arg0: i32) -> (i32, i32, i32, i32) {
    %c0_i32 = arith.constant 0 : i32
    %c0_i32_0 = arith.constant 0 : i32
    %c0_i32_1 = arith.constant 0 : i32
    %c0_i32_2 = arith.constant 0 : i32
    return %arg0, %c0_i32, %c0_i32_0, %c0_i32_1 : i32, i32, i32, i32
  }
}

</mosaic_0001>

<llo_original>
// kernel: residual_block_forward.2
$region0: #{residual_block_forward.2}
  #allocation0 [shape = 'u32[]', space=smem, size = 0x4, offset = 0x4, fixed_abs, tag = 'smem constant byte address 0x4 - core index']
  #allocation1 [shape = 'u32[144,128]{1,0:T(1,128)}', space=vmem, size = 0x12000, scoped, tag = 'internal scratch']
  %s0 = inlined_call_operand.vmem [shape: bf16[128,128], index: 0, kind: input, shape index: {}]
  %s1 = inlined_call_operand.vmem [shape: bf16[128,256], index: 1, kind: input, shape index: {}]
  %s2 = inlined_call_operand.vmem [shape: f32[1,256], index: 2, kind: input, shape index: {}]
  %s3 = inlined_call_operand.vmem [shape: bf16[128,128], index: 3, kind: output, shape index: {0}]
  %s4 = inlined_call_operand.vmem [shape: f32[128,128], index: 4, kind: output, shape index: {1}]
  %5 = xla_tuple %s3, %s4
  %s6 = sld [smem:[#allocation0]]
  $region53: #{residual_block_forward.2} parent=0
    _
  %s8 = ssub.s32 1, %s6
  %s9 = scalar_select 0, %s8, %s6
  loop: start=0, step=1, limit=4
  $region2: #{residual_block_forward.2} parent=0 // loop_pre_header
    _
  $region3: #{residual_block_forward.2} parent=0 // loop_header
    %s11 = sphi 0, %s15
    %p12 = scmp.ge.s32.totalorder %s11, 4
    %s21 = sphi 0, %s23
    %s24 = sphi 0, %s21
    %s25 = sphi 0, %s24
    %s41 = sphi 0, %s25
    %s45 = sphi 0, %s45
    %s47 = sphi 0, %s45
    %s48 = sphi 0, %s47
    %s62 = sphi 0, %s48
    %s66 = sphi 0, %s66
    %s68 = sphi 0, %s66
    %s69 = sphi 0, %s68
    %s83 = sphi 0, %s69
    %s89 = sphi 0, %s91
    %s92 = sphi 0, %s89
    %s93 = sphi 0, %s92
    %s109 = sphi 0, %s93
    %s115 = sphi 0, %s117
    %s118 = sphi 0, %s115
    %s119 = sphi 0, %s118
    %s135 = sphi 0, %s119
  $region4: #{residual_block_forward.2} parent=0 // loop_header_branch
    %14 = sbr.rel (%p12) target = $region8
  $region5: #{residual_block_forward.2} parent=0 // loop_body
    %s16 = ssub.s32 %s11, 1
    %s17 = ssub.s32 %s11, 2
    %s18 = sadd.s32 %s11, 1
    %s19 = ssub.s32 %s11, %s18
    %p20 = scmp.eq.s32.totalorder %s19, 0
    %s22 = sadd.s32 %s21, 1
    %s23 = scalar_select %p20, %s21, %s22
    %p26 = pneg %p20
    %p27 = scmp.eq.s32.totalorder %s11, 1
    %p28 = por %p26, %p27
    %p29 = scmp.ne.s32.totalorder %s21, %s24
    %p30 = scmp.eq.s32.totalorder %s11, 0
    %p31 = por %p29, %p30
    %p32 = scmp.ne.s32.totalorder %s21, %s24
    %p33 = scmp.eq.s32.totalorder %s16, 1
    %p34 = por %p32, %p33
    %p35 = scmp.ne.s32.totalorder %s24, %s25
    %p36 = scmp.eq.s32.totalorder %s16, 0
    %p37 = por %p35, %p36
    %p38 = scmp.ne.s32.totalorder %s24, %s25
    %p39 = scmp.eq.s32.totalorder %s17, 1
    %p40 = por %p38, %p39
    %p42 = scmp.ne.s32.totalorder %s25, %s41
    %p43 = scmp.eq.s32.totalorder %s17, 0
    %p44 = por %p42, %p43
    %s46 = sadd.s32 %s45, 1
    %p49 = scmp.eq.s32.totalorder %s11, 1
    %p50 = scmp.ne.s32.totalorder %s45, %s47
    %p51 = scmp.eq.s32.totalorder %s11, 0
    %p52 = por %p50, %p51
    %p53 = scmp.ne.s32.totalorder %s45, %s47
    %p54 = scmp.eq.s32.totalorder %s16, 1
    %p55 = por %p53, %p54
    %p56 = scmp.ne.s32.totalorder %s47, %s48
    %p57 = scmp.eq.s32.totalorder %s16, 0
    %p58 = por %p56, %p57
    %p59 = scmp.ne.s32.totalorder %s47, %s48
    %p60 = scmp.eq.s32.totalorder %s17, 1
    %p61 = por %p59, %p60
    %p63 = scmp.ne.s32.totalorder %s48, %s62
    %p64 = scmp.eq.s32.totalorder %s17, 0
    %p65 = por %p63, %p64
    %s67 = sadd.s32 %s66, 1
    %p70 = scmp.eq.s32.totalorder %s11, 1
    %p71 = scmp.ne.s32.totalorder %s66, %s68
    %p72 = scmp.eq.s32.totalorder %s11, 0
    %p73 = por %p71, %p72
    %p74 = scmp.ne.s32.totalorder %s66, %s68
    %p75 = scmp.eq.s32.totalorder %s16, 1
    %p76 = por %p74, %p75
    %p77 = scmp.ne.s32.totalorder %s68, %s69
    %p78 = scmp.eq.s32.totalorder %s16, 0
    %p79 = por %p77, %p78
    %p80 = scmp.ne.s32.totalorder %s68, %s69
    %p81 = scmp.eq.s32.totalorder %s17, 1
    %p82 = por %p80, %p81
    %p84 = scmp.ne.s32.totalorder %s69, %s83
    %p85 = scmp.eq.s32.totalorder %s17, 0
    %p86 = por %p84, %p85
    %s87 = ssub.s32 %s11, %s18
    %p88 = scmp.eq.s32.totalorder %s87, 0
    %s90 = sadd.s32 %s89, 1
    %s91 = scalar_select %p88, %s89, %s90
    %p94 = pneg %p88
    %p95 = scmp.eq.s32.totalorder %s11, 1
    %p96 = por %p94, %p95
    %p97 = scmp.ne.s32.totalorder %s89, %s92
    %p98 = scmp.eq.s32.totalorder %s11, 0
    %p99 = por %p97, %p98
    %p100 = scmp.ne.s32.totalorder %s89, %s92
    %p101 = scmp.eq.s32.totalorder %s16, 1
    %p102 = por %p100, %p101
    %p103 = scmp.ne.s32.totalorder %s92, %s93
    %p104 = scmp.eq.s32.totalorder %s16, 0
    %p105 = por %p103, %p104
    %p106 = scmp.ne.s32.totalorder %s92, %s93
    %p107 = scmp.eq.s32.totalorder %s17, 1
    %p108 = por %p106, %p107
    %p110 = scmp.ne.s32.totalorder %s93, %s109
    %p111 = scmp.eq.s32.totalorder %s17, 0
    %p112 = por %p110, %p111
    %s113 = ssub.s32 %s11, %s18
    %p114 = scmp.eq.s32.totalorder %s113, 0
    %s116 = sadd.s32 %s115, 1
    %s117 = scalar_select %p114, %s115, %s116
    %p120 = pneg %p114
    %p121 = scmp.eq.s32.totalorder %s11, 1
    %p122 = por %p120, %p121
    %p123 = scmp.ne.s32.totalorder %s115, %s118
    %p124 = scmp.eq.s32.totalorder %s11, 0
    %p125 = por %p123, %p124
    %p126 = scmp.ne.s32.totalorder %s115, %s118
    %p127 = scmp.eq.s32.totalorder %s16, 1
    %p128 = por %p126, %p127
    %p129 = scmp.ne.s32.totalorder %s118, %s119
    %p130 = scmp.eq.s32.totalorder %s16, 0
    %p131 = por %p129, %p130
    %p132 = scmp.ne.s32.totalorder %s118, %s119
    %p133 = scmp.eq.s32.totalorder %s17, 1
    %p134 = por %p132, %p133
    %p136 = scmp.ne.s32.totalorder %s119, %s135
    %p137 = scmp.eq.s32.totalorder %s17, 0
    %p138 = por %p136, %p137
    %p139 = scmp.le.s32.totalorder 1, %s11
    %p140 = scmp.lt.s32.totalorder %s11, 3
    %p141 = pnand %p139, %p140
    %p142 = pneg %p141
    // Predicated region
    $region9: #{residual_block_forward.2} parent=5 // pred_check
      _
    $region10: #{residual_block_forward.2} parent=5 // pred_check_branch
      %144 = sbr.rel (%p141) target = $region12
    $region11: #{residual_block_forward.2} parent=5 // pred_region
      %s145 = ssub.s32 %s11, 1
      // Predicated region
      $region13: #{residual_block_forward.2} parent=11 // pred_check
        %p146 = pneg %p58
      $region14: #{residual_block_forward.2} parent=11 // pred_check_branch
        %148 = sbr.rel (%p146) target = $region16
      $region15: #{residual_block_forward.2} parent=11 // pred_region
        _
      $region16: #{residual_block_forward.2} parent=11 // pred_fallthru
        _
      // Predicated region
      $region17: #{residual_block_forward.2} parent=11 // pred_check
        %p149 = pneg %p79
      $region18: #{residual_block_forward.2} parent=11 // pred_check_branch
        %151 = sbr.rel (%p149) target = $region20
      $region19: #{residual_block_forward.2} parent=11 // pred_region
        _
      $region20: #{residual_block_forward.2} parent=11 // pred_fallthru
        _
    $region12: #{residual_block_forward.2} parent=5 // pred_fallthru
      _
    %p152 = scmp.lt.s32.totalorder %s11, 2
    // Predicated region
    $region21: #{residual_block_forward.2} parent=5 // pred_check
      %p153 = pneg %p152
    $region22: #{residual_block_forward.2} parent=5 // pred_check_branch
      %155 = sbr.rel (%p153) target = $region24
    $region23: #{residual_block_forward.2} parent=5 // pred_region
      // Predicated region
      $region25: #{residual_block_forward.2} parent=23 // pred_check
        %p156 = pneg %p31
      $region26: #{residual_block_forward.2} parent=23 // pred_check_branch
        %158 = sbr.rel (%p156) target = $region28
      $region27: #{residual_block_forward.2} parent=23 // pred_region
        %s159 = smul.u32 8, %s11
        %p160 = scmp.lt.s32.totalorder %s159, 15
        %s161 = scalar_select %p160, %s159, 15
        %s162 = smul.addr %s161, 4
        %s163 = scalar_lea.vmem %s0, %s162
        %s164 = smul.u32 8, %s11
      $region28: #{residual_block_forward.2} parent=23 // pred_fallthru
        _
    $region24: #{residual_block_forward.2} parent=5 // pred_fallthru
      _
    %p165 = scmp.le.s32.totalorder 1, %s11
    %p166 = scmp.lt.s32.totalorder %s11, 3
    %p167 = pnand %p165, %p166
    %p168 = pneg %p167
    // Predicated region
    $region29: #{residual_block_forward.2} parent=5 // pred_check
      _
    $region30: #{residual_block_forward.2} parent=5 // pred_check_branch
      %170 = sbr.rel (%p167) target = $region32
    $region31: #{residual_block_forward.2} parent=5 // pred_region
      %s171 = ssub.s32 %s11, 1
      %s172 = smul.u32 8, %s16
      %p173 = scmp.lt.s32.totalorder %s172, 15
      %s174 = scalar_select %p173, %s172, 15
      %s175 = smul.addr %s174, 4
      %s176 = scalar_lea.vmem %s0, %s175
      %p177 = pneg %p37
      %p178 = pneg %p34
      %p179 = pneg %p58
      %p180 = pneg %p55
      %p181 = pneg %p79
      %p182 = pneg %p76
      %p183 = pneg %p105
      %p184 = pneg %p102
      %s185 = smul.u32 8, %s16
      %p186 = scmp.lt.s32.totalorder %s185, 15
      %s187 = scalar_select %p186, %s185, 15
      %s188 = smul.addr %s187, 4
      %s189 = scalar_lea.vmem %s3, %s188
      %p190 = pneg %p131
      %p191 = pneg %p128
      %s192 = smul.u32 8, %s16
      %p193 = scmp.lt.s32.totalorder %s192, 15
      %s194 = scalar_select %p193, %s192, 15
      %s195 = smul.addr %s194, 8
      %s196 = scalar_lea.vmem %s4, %s195
      %s197 = smul.u32 8, %s16
      %p198 = scmp.lt.s32.totalorder %s197, 15
      %s199 = scalar_select %p198, %s197, 15
      %s200 = smul.addr %s199, 4
      %s201 = scalar_lea.vmem %s0, %s200
      %s202 = smul.u32 8, %s16
      %s203 = smul.u32 8, %s16
      %p204 = scmp.lt.s32.totalorder %s203, 15
      %s205 = scalar_select %p204, %s203, 15
      %s206 = smul.addr %s205, 4
      %s207 = scalar_lea.vmem %s3, %s206
      %s208 = smul.u32 8, %s16
      %s209 = smul.u32 8, %s16
      %p210 = scmp.lt.s32.totalorder %s209, 15
      %s211 = scalar_select %p210, %s209, 15
      %s212 = smul.addr %s211, 8
      %s213 = scalar_lea.vmem %s4, %s212
      %s214 = smul.u32 8, %s16
      %v216 = vld [vmem:[%s201] sm:$0xf]
      %v217 = vld [vmem:[%s201 + $0x4] sm:$0xf]
      %v218 = vld [vmem:[%s201 + $0x8] sm:$0xf]
      %v219 = vld [vmem:[%s201 + $0xc] sm:$0xf]
      %v220 = vld [vmem:[%s201 + $0x10] sm:$0xf]
      %v221 = vld [vmem:[%s201 + $0x14] sm:$0xf]
      %v222 = vld [vmem:[%s201 + $0x18] sm:$0xf]
      %v223 = vld [vmem:[%s201 + $0x1c] sm:$0xf]
      %v224 = vld [vmem:[%s1] sm:$0xff]
      %v225 = vld [vmem:[%s1 + $0x8] sm:$0xff]
      %v226 = vld [vmem:[%s1 + $0x10] sm:$0xff]
      %v227 = vld [vmem:[%s1 + $0x18] sm:$0xff]
      %v228 = vld [vmem:[%s1 + $0x20] sm:$0xff]
      %v229 = vld [vmem:[%s1 + $0x28] sm:$0xff]
      %v230 = vld [vmem:[%s1 + $0x30] sm:$0xff]
      %v231 = vld [vmem:[%s1 + $0x38] sm:$0xff]
      %v232 = vld [vmem:[%s1 + $0x40] sm:$0xff]
      %v233 = vld [vmem:[%s1 + $0x48] sm:$0xff]
      %v234 = vld [vmem:[%s1 + $0x50] sm:$0xff]
      %v235 = vld [vmem:[%s1 + $0x58] sm:$0xff]
      %v236 = vld [vmem:[%s1 + $0x60] sm:$0xff]
      %v237 = vld [vmem:[%s1 + $0x68] sm:$0xff]
      %v238 = vld [vmem:[%s1 + $0x70] sm:$0xff]
      %v239 = vld [vmem:[%s1 + $0x78] sm:$0xff]
      %v240 = vld [vmem:[%s2] sm:$0x3]
      %v242 = vlaneseq
      %v243 = vshrl.u32 %v242, 7
      %v244 = vsub.s32 0, %v243
      %v245 = vrot.slane %v240, %v244
      %v246 = vlaneseq
      %v247 = vshrl.u32 %v246, 7
      %v248 = vsub.s32 1, %v247
      %v249 = vrot.slane %v240, %v248
      %v260 = vunpack.c.l.b16 %v216
      %v261 = vunpack.c.l.b16 %v217
      %v262 = vunpack.c.l.b16 %v218
      %v263 = vunpack.c.l.b16 %v219
      %v264 = vunpack.c.l.b16 %v220
      %v265 = vunpack.c.l.b16 %v221
      %v266 = vunpack.c.l.b16 %v222
      %v267 = vunpack.c.l.b16 %v223
      %v268 = vpack.c.b16 %v261, %v260
      %v269 = vpack.c.b16 %v263, %v262
      %v270 = vpack.c.b16 %v265, %v264
      %v271 = vpack.c.b16 %v267, %v266
      %v292 = vunpack.c.l.b16 %v224
      %v293 = vunpack.c.h.b16 %v224
      %v294 = vunpack.c.l.b16 %v225
      %v295 = vunpack.c.h.b16 %v225
      %v296 = vunpack.c.l.b16 %v226
      %v297 = vunpack.c.h.b16 %v226
      %v298 = vunpack.c.l.b16 %v227
      %v299 = vunpack.c.h.b16 %v227
      %v300 = vunpack.c.l.b16 %v228
      %v301 = vunpack.c.h.b16 %v228
      %v302 = vunpack.c.l.b16 %v229
      %v303 = vunpack.c.h.b16 %v229
      %v304 = vunpack.c.l.b16 %v230
      %v305 = vunpack.c.h.b16 %v230
      %v306 = vunpack.c.l.b16 %v231
      %v307 = vunpack.c.h.b16 %v231
      %v308 = vunpack.c.l.b16 %v232
      %v309 = vunpack.c.h.b16 %v232
      %v310 = vunpack.c.l.b16 %v233
      %v311 = vunpack.c.h.b16 %v233
      %v312 = vunpack.c.l.b16 %v234
      %v313 = vunpack.c.h.b16 %v234
      %v314 = vunpack.c.l.b16 %v235
      %v315 = vunpack.c.h.b16 %v235
      %v316 = vunpack.c.l.b16 %v236
      %v317 = vunpack.c.h.b16 %v236
      %v318 = vunpack.c.l.b16 %v237
      %v319 = vunpack.c.h.b16 %v237
      %v320 = vunpack.c.l.b16 %v238
      %v321 = vunpack.c.h.b16 %v238
      %v322 = vunpack.c.l.b16 %v239
      %v323 = vunpack.c.h.b16 %v239
      %v324 = vpack.c.b16 %v294, %v292
      %v325 = vpack.c.b16 %v295, %v293
      %v326 = vpack.c.b16 %v298, %v296
      %v327 = vpack.c.b16 %v299, %v297
      %v328 = vpack.c.b16 %v302, %v300
      %v329 = vpack.c.b16 %v303, %v301
      %v330 = vpack.c.b16 %v306, %v304
      %v331 = vpack.c.b16 %v307, %v305
      %v332 = vpack.c.b16 %v310, %v308
      %v333 = vpack.c.b16 %v311, %v309
      %v334 = vpack.c.b16 %v314, %v312
      %v335 = vpack.c.b16 %v315, %v313
      %v336 = vpack.c.b16 %v318, %v316
      %v337 = vpack.c.b16 %v319, %v317
      %v338 = vpack.c.b16 %v322, %v320
      %v339 = vpack.c.b16 %v323, %v321
      %356 = vmatprep.subr.bf16.mxu0 %v325
      %357 = vmatpush1.bf16.msra.mxu0 %v324
      %358 = vmatprep.subr.bf16.mxu0 %v327
      %359 = vmatpush1.bf16.msra.mxu0 %v326
      %360 = vmatprep.subr.bf16.mxu0 %v329
      %361 = vmatpush1.bf16.msra.mxu0 %v328
      %362 = vmatprep.subr.bf16.mxu0 %v331
      %363 = vmatpush1.bf16.msra.mxu0 %v330
      %364 = vmatprep.subr.bf16.mxu0 %v333
      %365 = vmatpush1.bf16.msra.mxu0 %v332
      %366 = vmatprep.subr.bf16.mxu0 %v335
      %367 = vmatpush1.bf16.msra.mxu0 %v334
      %368 = vmatprep.subr.bf16.mxu0 %v337
      %369 = vmatpush1.bf16.msra.mxu0 %v336
      %370 = vmatprep.subr.bf16.mxu0 %v339
      %371 = vmatpush1.bf16.msra.mxu0 %v338
      %372 = vmatprep.subr.bf16.mxu0 0
      %373 = vmatpush1.bf16.msra.mxu0 0
      %374 = vmatprep.subr.bf16.mxu0 0
      %375 = vmatpush1.bf16.msra.mxu0 0
      %376 = vmatprep.subr.bf16.mxu0 0
      %377 = vmatpush1.bf16.msra.mxu0 0
      %378 = vmatprep.subr.bf16.mxu0 0
      %379 = vmatpush1.bf16.msra.mxu0 0
      %380 = vmatprep.subr.bf16.mxu0 0
      %381 = vmatpush1.bf16.msra.mxu0 0
      %382 = vmatprep.subr.bf16.mxu0 0
      %383 = vmatpush1.bf16.msra.mxu0 0
      %384 = vmatprep.subr.bf16.mxu0 0
      %385 = vmatpush1.bf16.msra.mxu0 0
      %386 = vmatprep.subr.bf16.mxu0 0
      %387 = vmatpush1.bf16.msra.mxu0 0
      %388 = vmatprep.mubr.bf16.mxu0 0
      %389 = vmatmul.mubr.bf16.gmra.mrb[0].mxu0 %v268
      %v390 = vpop.f32.mrb[0].mxu0
      %v391 = vadd.f32 %v245, %v390
      %v392 = vpop.f32.mrb[0].mxu0
      %v393 = vadd.f32 %v249, %v392
      %v394 = vpop.f32.mrb[0].mxu0
      %v395 = vadd.f32 %v245, %v394
      %v396 = vpop.f32.mrb[0].mxu0
      %v397 = vadd.f32 %v249, %v396
      %398 = vmatprep.mubr.bf16.mxu0 0
      %399 = vmatmul.mubr.bf16.gmra.mrb[0].mxu0 %v269
      %v400 = vpop.f32.mrb[0].mxu0
      %v401 = vadd.f32 %v245, %v400
      %v402 = vpop.f32.mrb[0].mxu0
      %v403 = vadd.f32 %v249, %v402
      %v404 = vpop.f32.mrb[0].mxu0
      %v405 = vadd.f32 %v245, %v404
      %v406 = vpop.f32.mrb[0].mxu0
      %v407 = vadd.f32 %v249, %v406
      %408 = vmatprep.mubr.bf16.mxu0 0
      %409 = vmatmul.mubr.bf16.gmra.mrb[0].mxu0 %v270
      %v410 = vpop.f32.mrb[0].mxu0
      %v411 = vadd.f32 %v245, %v410
      %v412 = vpop.f32.mrb[0].mxu0
      %v413 = vadd.f32 %v249, %v412
      %v414 = vpop.f32.mrb[0].mxu0
      %v415 = vadd.f32 %v245, %v414
      %v416 = vpop.f32.mrb[0].mxu0
      %v417 = vadd.f32 %v249, %v416
      %418 = vmatprep.mubr.bf16.mxu0 0
      %419 = vmatmul.mubr.bf16.gmra.mrb[0].mxu0 %v271
      %v420 = vpop.f32.mrb[0].mxu0
      %v421 = vadd.f32 %v245, %v420
      %v422 = vpop.f32.mrb[0].mxu0
      %v423 = vadd.f32 %v249, %v422
      %v424 = vpop.f32.mrb[0].mxu0
      %v425 = vadd.f32 %v245, %v424
      %v426 = vpop.f32.mrb[0].mxu0
      %v427 = vadd.f32 %v249, %v426
      %428 = vdwg.mxu0
      %v429 = vmax.f32 %v391, 0.0
      %v430 = vmax.f32 %v395, 0.0
      %v431 = vmax.f32 %v401, 0.0
      %v432 = vmax.f32 %v405, 0.0
      %v433 = vmax.f32 %v411, 0.0
      %v434 = vmax.f32 %v415, 0.0
      %v435 = vmax.f32 %v421, 0.0
      %v436 = vmax.f32 %v425, 0.0
      %v437 = vpack.c.bf16 %v430, %v429
      %v438 = vpack.c.bf16 %v432, %v431
      %v439 = vpack.c.bf16 %v434, %v433
      %v440 = vpack.c.bf16 %v436, %v435
      %v445 = vunpack.c.l.b16 %v437
      %v446 = vunpack.c.h.b16 %v437
      %v447 = vunpack.c.l.b16 %v438
      %v448 = vunpack.c.h.b16 %v438
      %v449 = vunpack.c.l.b16 %v439
      %v450 = vunpack.c.h.b16 %v439
      %v451 = vunpack.c.l.b16 %v440
      %v452 = vunpack.c.h.b16 %v440
      %v453 = vpack.c.b16 %v445, %v445
      %v454 = vpack.c.b16 %v446, %v446
      %v455 = vpack.c.b16 %v447, %v447
      %v456 = vpack.c.b16 %v448, %v448
      %v457 = vpack.c.b16 %v449, %v449
      %v458 = vpack.c.b16 %v450, %v450
      %v459 = vpack.c.b16 %v451, %v451
      %v460 = vpack.c.b16 %v452, %v452
      %469 = vst [vmem:[%s207] sm:$0xf] %v453
      %470 = vst [vmem:[%s207 + $0x4] sm:$0xf] %v454
      %471 = vst [vmem:[%s207 + $0x8] sm:$0xf] %v455
      %472 = vst [vmem:[%s207 + $0xc] sm:$0xf] %v456
      %473 = vst [vmem:[%s207 + $0x10] sm:$0xf] %v457
      %474 = vst [vmem:[%s207 + $0x14] sm:$0xf] %v458
      %475 = vst [vmem:[%s207 + $0x18] sm:$0xf] %v459
      %476 = vst [vmem:[%s207 + $0x1c] sm:$0xf] %v460
      %477 = vst [vmem:[%s213] sm:$0xff] %v393
      %478 = vst [vmem:[%s213 + $0x8] sm:$0xff] %v397
      %479 = vst [vmem:[%s213 + $0x10] sm:$0xff] %v403
      %480 = vst [vmem:[%s213 + $0x18] sm:$0xff] %v407
      %481 = vst [vmem:[%s213 + $0x20] sm:$0xff] %v413
      %482 = vst [vmem:[%s213 + $0x28] sm:$0xff] %v417
      %483 = vst [vmem:[%s213 + $0x30] sm:$0xff] %v423
      %484 = vst [vmem:[%s213 + $0x38] sm:$0xff] %v427
      %s485 = smul.u32 8, %s16
      %p486 = scmp.lt.s32.totalorder %s485, 15
      %s487 = scalar_select %p486, %s485, 15
      %s488 = smul.addr %s487, 4
      %s489 = scalar_lea.vmem %s3, %s488
      %s490 = smul.u32 8, %s16
      %p491 = scmp.lt.s32.totalorder %s490, 15
      %s492 = scalar_select %p491, %s490, 15
      %s493 = smul.addr %s492, 8
      %s494 = scalar_lea.vmem %s4, %s493
      // Predicated region
      $region33: #{residual_block_forward.2} parent=31 // pred_check
        %p495 = pneg %p102
      $region34: #{residual_block_forward.2} parent=31 // pred_check_branch
        %497 = sbr.rel (%p495) target = $region36
      $region35: #{residual_block_forward.2} parent=31 // pred_region
        %s498 = smul.u32 8, %s16
      $region36: #{residual_block_forward.2} parent=31 // pred_fallthru
        _
      // Predicated region
      $region37: #{residual_block_forward.2} parent=31 // pred_check
        %p499 = pneg %p128
      $region38: #{residual_block_forward.2} parent=31 // pred_check_branch
        %501 = sbr.rel (%p499) target = $region40
      $region39: #{residual_block_forward.2} parent=31 // pred_region
        %s502 = smul.u32 8, %s16
      $region40: #{residual_block_forward.2} parent=31 // pred_fallthru
        _
    $region32: #{residual_block_forward.2} parent=5 // pred_fallthru
      _
    %p503 = scmp.le.s32.totalorder 2, %s11
    // Predicated region
    $region41: #{residual_block_forward.2} parent=5 // pred_check
      %p504 = pneg %p503
    $region42: #{residual_block_forward.2} parent=5 // pred_check_branch
      %506 = sbr.rel (%p504) target = $region44
    $region43: #{residual_block_forward.2} parent=5 // pred_region
      %s507 = ssub.s32 %s11, 2
      // Predicated region
      $region45: #{residual_block_forward.2} parent=43 // pred_check
        %p508 = pneg %p108
      $region46: #{residual_block_forward.2} parent=43 // pred_check_branch
        %510 = sbr.rel (%p508) target = $region48
      $region47: #{residual_block_forward.2} parent=43 // pred_region
        %s511 = smul.u32 8, %s17
        %p512 = scmp.lt.s32.totalorder %s511, 15
        %s513 = scalar_select %p512, %s511, 15
        %s514 = smul.addr %s513, 4
        %s515 = scalar_lea.vmem %s3, %s514
      $region48: #{residual_block_forward.2} parent=43 // pred_fallthru
        _
      // Predicated region
      $region49: #{residual_block_forward.2} parent=43 // pred_check
        %p516 = pneg %p134
      $region50: #{residual_block_forward.2} parent=43 // pred_check_branch
        %518 = sbr.rel (%p516) target = $region52
      $region51: #{residual_block_forward.2} parent=43 // pred_region
        %s519 = smul.u32 8, %s17
        %p520 = scmp.lt.s32.totalorder %s519, 15
        %s521 = scalar_select %p520, %s519, 15
        %s522 = smul.addr %s521, 8
        %s523 = scalar_lea.vmem %s4, %s522
      $region52: #{residual_block_forward.2} parent=43 // pred_fallthru
        _
    $region44: #{residual_block_forward.2} parent=5 // pred_fallthru
      _
  $region6: #{residual_block_forward.2} parent=0 // loop_footer
    %s15 = sadd.s32 1, %s11
  $region7: #{residual_block_forward.2} parent=0 // loop_footer_branch
    %10 = sbr.rel target = $region3
  $region8: #{residual_block_forward.2} parent=0 // loop_exit
    _

// kernel: residual_block_forward.3
$region0: #{residual_block_forward.3}
  #allocation0 [shape = 'u32[]', space=smem, size = 0x4, offset = 0x4, fixed_abs, tag = 'smem constant byte address 0x4 - core index']
  #allocation1 [shape = 'u32[144,128]{1,0:T(1,128)}', space=vmem, size = 0x12000, scoped, tag = 'internal scratch']
  %s0 = inlined_call_operand.vmem [shape: bf16[2,10,10,128], index: 0, kind: input, shape index: {}]
  %s1 = inlined_call_operand.vmem [shape: bf16[9,128,128], index: 1, kind: input, shape index: {}]
  %s2 = inlined_call_operand.vmem [shape: f32[1,128], index: 2, kind: input, shape index: {}]
  %s3 = inlined_call_operand.vmem [shape: f32[2,8,8,128], index: 3, kind: input, shape index: {}]
  %s4 = inlined_call_operand.vmem [shape: bf16[2,8,8,128], index: 4, kind: output, shape index: {}]
  %s5 = sld [smem:[#allocation0]]
  $region49: #{residual_block_forward.3} parent=0
    _
  %s7 = ssub.s32 1, %s5
  %s8 = scalar_select 0, %s7, %s5
  loop: start=0, step=1, limit=4
  $region2: #{residual_block_forward.3} parent=0 // loop_pre_header
    _
  $region3: #{residual_block_forward.3} parent=0 // loop_header
    %s10 = sphi 0, %s14
    %p11 = scmp.ge.s32.totalorder %s10, 4
    %s20 = sphi 0, %s22
    %s23 = sphi 0, %s20
    %s24 = sphi 0, %s23
    %s40 = sphi 0, %s24
    %s44 = sphi 0, %s44
    %s46 = sphi 0, %s44
    %s47 = sphi 0, %s46
    %s61 = sphi 0, %s47
    %s65 = sphi 0, %s65
    %s67 = sphi 0, %s65
    %s68 = sphi 0, %s67
    %s82 = sphi 0, %s68
    %s88 = sphi 0, %s90
    %s91 = sphi 0, %s88
    %s92 = sphi 0, %s91
    %s108 = sphi 0, %s92
    %s114 = sphi 0, %s116
    %s117 = sphi 0, %s114
    %s118 = sphi 0, %s117
    %s134 = sphi 0, %s118
  $region4: #{residual_block_forward.3} parent=0 // loop_header_branch
    %13 = sbr.rel (%p11) target = $region8
  $region5: #{residual_block_forward.3} parent=0 // loop_body
    %s15 = ssub.s32 %s10, 1
    %s16 = ssub.s32 %s10, 2
    %s17 = sadd.s32 %s10, 1
    %s18 = ssub.s32 %s10, %s17
    %p19 = scmp.eq.s32.totalorder %s18, 0
    %s21 = sadd.s32 %s20, 1
    %s22 = scalar_select %p19, %s20, %s21
    %p25 = pneg %p19
    %p26 = scmp.eq.s32.totalorder %s10, 1
    %p27 = por %p25, %p26
    %p28 = scmp.ne.s32.totalorder %s20, %s23
    %p29 = scmp.eq.s32.totalorder %s10, 0
    %p30 = por %p28, %p29
    %p31 = scmp.ne.s32.totalorder %s20, %s23
    %p32 = scmp.eq.s32.totalorder %s15, 1
    %p33 = por %p31, %p32
    %p34 = scmp.ne.s32.totalorder %s23, %s24
    %p35 = scmp.eq.s32.totalorder %s15, 0
    %p36 = por %p34, %p35
    %p37 = scmp.ne.s32.totalorder %s23, %s24
    %p38 = scmp.eq.s32.totalorder %s16, 1
    %p39 = por %p37, %p38
    %p41 = scmp.ne.s32.totalorder %s24, %s40
    %p42 = scmp.eq.s32.totalorder %s16, 0
    %p43 = por %p41, %p42
    %s45 = sadd.s32 %s44, 1
    %p48 = scmp.eq.s32.totalorder %s10, 1
    %p49 = scmp.ne.s32.totalorder %s44, %s46
    %p50 = scmp.eq.s32.totalorder %s10, 0
    %p51 = por %p49, %p50
    %p52 = scmp.ne.s32.totalorder %s44, %s46
    %p53 = scmp.eq.s32.totalorder %s15, 1
    %p54 = por %p52, %p53
    %p55 = scmp.ne.s32.totalorder %s46, %s47
    %p56 = scmp.eq.s32.totalorder %s15, 0
    %p57 = por %p55, %p56
    %p58 = scmp.ne.s32.totalorder %s46, %s47
    %p59 = scmp.eq.s32.totalorder %s16, 1
    %p60 = por %p58, %p59
    %p62 = scmp.ne.s32.totalorder %s47, %s61
    %p63 = scmp.eq.s32.totalorder %s16, 0
    %p64 = por %p62, %p63
    %s66 = sadd.s32 %s65, 1
    %p69 = scmp.eq.s32.totalorder %s10, 1
    %p70 = scmp.ne.s32.totalorder %s65, %s67
    %p71 = scmp.eq.s32.totalorder %s10, 0
    %p72 = por %p70, %p71
    %p73 = scmp.ne.s32.totalorder %s65, %s67
    %p74 = scmp.eq.s32.totalorder %s15, 1
    %p75 = por %p73, %p74
    %p76 = scmp.ne.s32.totalorder %s67, %s68
    %p77 = scmp.eq.s32.totalorder %s15, 0
    %p78 = por %p76, %p77
    %p79 = scmp.ne.s32.totalorder %s67, %s68
    %p80 = scmp.eq.s32.totalorder %s16, 1
    %p81 = por %p79, %p80
    %p83 = scmp.ne.s32.totalorder %s68, %s82
    %p84 = scmp.eq.s32.totalorder %s16, 0
    %p85 = por %p83, %p84
    %s86 = ssub.s32 %s10, %s17
    %p87 = scmp.eq.s32.totalorder %s86, 0
    %s89 = sadd.s32 %s88, 1
    %s90 = scalar_select %p87, %s88, %s89
    %p93 = pneg %p87
    %p94 = scmp.eq.s32.totalorder %s10, 1
    %p95 = por %p93, %p94
    %p96 = scmp.ne.s32.totalorder %s88, %s91
    %p97 = scmp.eq.s32.totalorder %s10, 0
    %p98 = por %p96, %p97
    %p99 = scmp.ne.s32.totalorder %s88, %s91
    %p100 = scmp.eq.s32.totalorder %s15, 1
    %p101 = por %p99, %p100
    %p102 = scmp.ne.s32.totalorder %s91, %s92
    %p103 = scmp.eq.s32.totalorder %s15, 0
    %p104 = por %p102, %p103
    %p105 = scmp.ne.s32.totalorder %s91, %s92
    %p106 = scmp.eq.s32.totalorder %s16, 1
    %p107 = por %p105, %p106
    %p109 = scmp.ne.s32.totalorder %s92, %s108
    %p110 = scmp.eq.s32.totalorder %s16, 0
    %p111 = por %p109, %p110
    %s112 = ssub.s32 %s10, %s17
    %p113 = scmp.eq.s32.totalorder %s112, 0
    %s115 = sadd.s32 %s114, 1
    %s116 = scalar_select %p113, %s114, %s115
    %p119 = pneg %p113
    %p120 = scmp.eq.s32.totalorder %s10, 1
    %p121 = por %p119, %p120
    %p122 = scmp.ne.s32.totalorder %s114, %s117
    %p123 = scmp.eq.s32.totalorder %s10, 0
    %p124 = por %p122, %p123
    %p125 = scmp.ne.s32.totalorder %s114, %s117
    %p126 = scmp.eq.s32.totalorder %s15, 1
    %p127 = por %p125, %p126
    %p128 = scmp.ne.s32.totalorder %s117, %s118
    %p129 = scmp.eq.s32.totalorder %s15, 0
    %p130 = por %p128, %p129
    %p131 = scmp.ne.s32.totalorder %s117, %s118
    %p132 = scmp.eq.s32.totalorder %s16, 1
    %p133 = por %p131, %p132
    %p135 = scmp.ne.s32.totalorder %s118, %s134
    %p136 = scmp.eq.s32.totalorder %s16, 0
    %p137 = por %p135, %p136
    %p138 = scmp.le.s32.totalorder 1, %s10
    %p139 = scmp.lt.s32.totalorder %s10, 3
    %p140 = pnand %p138, %p139
    %p141 = pneg %p140
    // Predicated region
    $region9: #{residual_block_forward.3} parent=5 // pred_check
      _
    $region10: #{residual_block_forward.3} parent=5 // pred_check_branch
      %143 = sbr.rel (%p140) target = $region12
    $region11: #{residual_block_forward.3} parent=5 // pred_region
      %s144 = ssub.s32 %s10, 1
      // Predicated region
      $region13: #{residual_block_forward.3} parent=11 // pred_check
        %p145 = pneg %p57
      $region14: #{residual_block_forward.3} parent=11 // pred_check_branch
        %147 = sbr.rel (%p145) target = $region16
      $region15: #{residual_block_forward.3} parent=11 // pred_region
        _
      $region16: #{residual_block_forward.3} parent=11 // pred_fallthru
        _
      // Predicated region
      $region17: #{residual_block_forward.3} parent=11 // pred_check
        %p148 = pneg %p78
      $region18: #{residual_block_forward.3} parent=11 // pred_check_branch
        %150 = sbr.rel (%p148) target = $region20
      $region19: #{residual_block_forward.3} parent=11 // pred_region
        _
      $region20: #{residual_block_forward.3} parent=11 // pred_fallthru
        _
    $region12: #{residual_block_forward.3} parent=5 // pred_fallthru
      _
    %p151 = scmp.lt.s32.totalorder %s10, 2
    // Predicated region
    $region21: #{residual_block_forward.3} parent=5 // pred_check
      %p152 = pneg %p151
    $region22: #{residual_block_forward.3} parent=5 // pred_check_branch
      %154 = sbr.rel (%p152) target = $region24
    $region23: #{residual_block_forward.3} parent=5 // pred_region
      // Predicated region
      $region25: #{residual_block_forward.3} parent=23 // pred_check
        %p155 = pneg %p30
      $region26: #{residual_block_forward.3} parent=23 // pred_check_branch
        %157 = sbr.rel (%p155) target = $region28
      $region27: #{residual_block_forward.3} parent=23 // pred_region
        %p158 = scmp.lt.s32.totalorder %s10, 1
        %s159 = scalar_select %p158, %s10, 1
        %s160 = smul.addr %s159, 20
        %s161 = smul.addr %s160, 4
        %s162 = scalar_lea.vmem %s0, %s161
      $region28: #{residual_block_forward.3} parent=23 // pred_fallthru
        _
      // Predicated region
      $region29: #{residual_block_forward.3} parent=23 // pred_check
        %p163 = pneg %p98
      $region30: #{residual_block_forward.3} parent=23 // pred_check_branch
        %165 = sbr.rel (%p163) target = $region32
      $region31: #{residual_block_forward.3} parent=23 // pred_region
        %p166 = scmp.lt.s32.totalorder %s10, 1
        %s167 = scalar_select %p166, %s10, 1
        %s168 = smul.addr %s167, 8
        %s169 = smul.addr %s168, 8
        %s170 = scalar_lea.vmem %s3, %s169
      $region32: #{residual_block_forward.3} parent=23 // pred_fallthru
        _
    $region24: #{residual_block_forward.3} parent=5 // pred_fallthru
      _
    %p171 = scmp.le.s32.totalorder 1, %s10
    %p172 = scmp.lt.s32.totalorder %s10, 3
    %p173 = pnand %p171, %p172
    %p174 = pneg %p173
    // Predicated region
    $region33: #{residual_block_forward.3} parent=5 // pred_check
      _
    $region34: #{residual_block_forward.3} parent=5 // pred_check_branch
      %176 = sbr.rel (%p173) target = $region36
    $region35: #{residual_block_forward.3} parent=5 // pred_region
      %s177 = ssub.s32 %s10, 1
      %p178 = scmp.lt.s32.totalorder %s15, 1
      %s179 = scalar_select %p178, %s15, 1
      %s180 = smul.addr %s179, 20
      %s181 = smul.addr %s180, 4
      %s182 = scalar_lea.vmem %s0, %s181
      %p183 = pneg %p36
      %p184 = pneg %p33
      %p185 = pneg %p57
      %p186 = pneg %p54
      %p187 = pneg %p78
      %p188 = pneg %p75
      %p189 = scmp.lt.s32.totalorder %s15, 1
      %s190 = scalar_select %p189, %s15, 1
      %s191 = smul.addr %s190, 8
      %s192 = smul.addr %s191, 8
      %s193 = scalar_lea.vmem %s3, %s192
      %p194 = pneg %p104
      %p195 = pneg %p101
      %p196 = pneg %p130
      %p197 = pneg %p127
      %p198 = scmp.lt.s32.totalorder %s15, 1
      %s199 = scalar_select %p198, %s15, 1
      %s200 = smul.addr %s199, 8
      %s201 = smul.addr %s200, 4
      %s202 = scalar_lea.vmem %s4, %s201
      %p203 = scmp.lt.s32.totalorder %s15, 1
      %s204 = scalar_select %p203, %s15, 1
      %s205 = smul.addr %s204, 20
      %s206 = smul.addr %s205, 4
      %s207 = scalar_lea.vmem %s0, %s206
      %p208 = scmp.lt.s32.totalorder %s15, 1
      %s209 = scalar_select %p208, %s15, 1
      %s210 = smul.addr %s209, 8
      %s211 = smul.addr %s210, 8
      %s212 = scalar_lea.vmem %s3, %s211
      %p213 = scmp.lt.s32.totalorder %s15, 1
      %s214 = scalar_select %p213, %s15, 1
      %s215 = smul.addr %s214, 8
      %s216 = smul.addr %s215, 4
      %s217 = scalar_lea.vmem %s4, %s216
      %v219 = vld [vmem:[%s207] sm:$0xf]
      %v220 = vld [vmem:[%s207 + $0x8] sm:$0xf]
      %v221 = vld [vmem:[%s207 + $0x10] sm:$0xf]
      %v222 = vld [vmem:[%s207 + $0x18] sm:$0xf]
      %v223 = vld [vmem:[%s207 + $0x20] sm:$0xf]
      %v224 = vld [vmem:[%s207 + $0x28] sm:$0xf]
      %v225 = vld [vmem:[%s207 + $0x30] sm:$0xf]
      %v226 = vld [vmem:[%s207 + $0x38] sm:$0xf]
      %v227 = vld [vmem:[%s1] sm:$0xf]
      %v228 = vld [vmem:[%s1 + $0x4] sm:$0xf]
      %v229 = vld [vmem:[%s1 + $0x8] sm:$0xf]
      %v230 = vld [vmem:[%s1 + $0xc] sm:$0xf]
      %v231 = vld [vmem:[%s1 + $0x10] sm:$0xf]
      %v232 = vld [vmem:[%s1 + $0x14] sm:$0xf]
      %v233 = vld [vmem:[%s1 + $0x18] sm:$0xf]
      %v234 = vld [vmem:[%s1 + $0x1c] sm:$0xf]
      %v235 = vld [vmem:[%s1 + $0x20] sm:$0xf]
      %v236 = vld [vmem:[%s1 + $0x24] sm:$0xf]
      %v237 = vld [vmem:[%s1 + $0x28] sm:$0xf]
      %v238 = vld [vmem:[%s1 + $0x2c] sm:$0xf]
      %v239 = vld [vmem:[%s1 + $0x30] sm:$0xf]
      %v240 = vld [vmem:[%s1 + $0x34] sm:$0xf]
      %v241 = vld [vmem:[%s1 + $0x38] sm:$0xf]
      %v242 = vld [vmem:[%s1 + $0x3c] sm:$0xf]
      %v243 = vld [vmem:[%s207 + $0x4] sm:$0x1]
      %v244 = vld [vmem:[%s207 + $0xc] sm:$0x1]
      %v245 = vld [vmem:[%s207 + $0x14] sm:$0x1]
      %v246 = vld [vmem:[%s207 + $0x1c] sm:$0x1]
      %v247 = vld [vmem:[%s207 + $0x24] sm:$0x1]
      %v248 = vld [vmem:[%s207 + $0x2c] sm:$0x1]
      %v249 = vld [vmem:[%s207 + $0x34] sm:$0x1]
      %v250 = vld [vmem:[%s207 + $0x3c] sm:$0x1]
      %vm251 = vsmask.f32 3328
      %vm252 = vsmask.f32 7440
      %vm253 = vmor %vm251, %vm252
      %v255 = vshrl.u32 %v219, 16
      %v257 = vrot.slane %v255, 4
      %v258 = vshll.u32 %v219, 16
      %v260 = vrot.slane %v258, 5
      %v261 = vor.u32 %v257, %v260
      %v262 = vrot.slane %v261, 4
      %v264 = vshll.u32 %v243, 16
      %v266 = vrot.slane %v264, 5
      %v267 = vsel %vm253, %v262, %v266
      %v269 = vshrl.u32 %v220, 16
      %v271 = vrot.slane %v269, 4
      %v272 = vshll.u32 %v220, 16
      %v274 = vrot.slane %v272, 5
      %v275 = vor.u32 %v271, %v274
      %v276 = vrot.slane %v275, 4
      %v278 = vshll.u32 %v244, 16
      %v280 = vrot.slane %v278, 5
      %v281 = vsel %vm253, %v276, %v280
      %v283 = vshrl.u32 %v221, 16
      %v285 = vrot.slane %v283, 4
      %v286 = vshll.u32 %v221, 16
      %v288 = vrot.slane %v286, 5
      %v289 = vor.u32 %v285, %v288
      %v290 = vrot.slane %v289, 4
      %v292 = vshll.u32 %v245, 16
      %v294 = vrot.slane %v292, 5
      %v295 = vsel %vm253, %v290, %v294
      %v297 = vshrl.u32 %v222, 16
      %v299 = vrot.slane %v297, 4
      %v300 = vshll.u32 %v222, 16
      %v302 = vrot.slane %v300, 5
      %v303 = vor.u32 %v299, %v302
      %v304 = vrot.slane %v303, 4
      %v306 = vshll.u32 %v246, 16
      %v308 = vrot.slane %v306, 5
      %v309 = vsel %vm253, %v304, %v308
      %v311 = vshrl.u32 %v223, 16
      %v313 = vrot.slane %v311, 4
      %v314 = vshll.u32 %v223, 16
      %v316 = vrot.slane %v314, 5
      %v317 = vor.u32 %v313, %v316
      %v318 = vrot.slane %v317, 4
      %v320 = vshll.u32 %v247, 16
      %v322 = vrot.slane %v320, 5
      %v323 = vsel %vm253, %v318, %v322
      %v325 = vshrl.u32 %v224, 16
      %v327 = vrot.slane %v325, 4
      %v328 = vshll.u32 %v224, 16
      %v330 = vrot.slane %v328, 5
      %v331 = vor.u32 %v327, %v330
      %v332 = vrot.slane %v331, 4
      %v334 = vshll.u32 %v248, 16
      %v336 = vrot.slane %v334, 5
      %v337 = vsel %vm253, %v332, %v336
      %v339 = vshrl.u32 %v225, 16
      %v341 = vrot.slane %v339, 4
      %v342 = vshll.u32 %v225, 16
      %v344 = vrot.slane %v342, 5
      %v345 = vor.u32 %v341, %v344
      %v346 = vrot.slane %v345, 4
      %v348 = vshll.u32 %v249, 16
      %v350 = vrot.slane %v348, 5
      %v351 = vsel %vm253, %v346, %v350
      %v353 = vshrl.u32 %v226, 16
      %v355 = vrot.slane %v353, 4
      %v356 = vshll.u32 %v226, 16
      %v358 = vrot.slane %v356, 5
      %v359 = vor.u32 %v355, %v358
      %v360 = vrot.slane %v359, 4
      %v362 = vshll.u32 %v250, 16
      %v364 = vrot.slane %v362, 5
      %v365 = vsel %vm253, %v360, %v364
      %s366 = scalar_lea.vmem %s1, 64
      %v367 = vld [vmem:[%s366] sm:$0xf]
      %v368 = vld [vmem:[%s366 + $0x4] sm:$0xf]
      %v369 = vld [vmem:[%s366 + $0x8] sm:$0xf]
      %v370 = vld [vmem:[%s366 + $0xc] sm:$0xf]
      %v371 = vld [vmem:[%s366 + $0x10] sm:$0xf]
      %v372 = vld [vmem:[%s366 + $0x14] sm:$0xf]
      %v373 = vld [vmem:[%s366 + $0x18] sm:$0xf]
      %v374 = vld [vmem:[%s366 + $0x1c] sm:$0xf]
      %v375 = vld [vmem:[%s366 + $0x20] sm:$0xf]
      %v376 = vld [vmem:[%s366 + $0x24] sm:$0xf]
      %v377 = vld [vmem:[%s366 + $0x28] sm:$0xf]
      %v378 = vld [vmem:[%s366 + $0x2c] sm:$0xf]
      %v379 = vld [vmem:[%s366 + $0x30] sm:$0xf]
      %v380 = vld [vmem:[%s366 + $0x34] sm:$0xf]
      %v381 = vld [vmem:[%s366 + $0x38] sm:$0xf]
      %v382 = vld [vmem:[%s366 + $0x3c] sm:$0xf]
      %v383 = vunpack.c.l.b16 %v267
      %v384 = vunpack.c.l.b16 %v281
      %v385 = vunpack.c.l.b16 %v295
      %v386 = vunpack.c.l.b16 %v309
      %v387 = vunpack.c.l.b16 %v323
      %v388 = vunpack.c.l.b16 %v337
      %v389 = vunpack.c.l.b16 %v351
      %v390 = vunpack.c.l.b16 %v365
      %v391 = vpack.c.b16 %v384, %v383
      %v392 = vpack.c.b16 %v386, %v385
      %v393 = vpack.c.b16 %v388, %v387
      %v394 = vpack.c.b16 %v390, %v389
      %v415 = vunpack.c.l.b16 %v367
      %v416 = vunpack.c.l.b16 %v368
      %v417 = vunpack.c.l.b16 %v369
      %v418 = vunpack.c.l.b16 %v370
      %v419 = vunpack.c.l.b16 %v371
      %v420 = vunpack.c.l.b16 %v372
      %v421 = vunpack.c.l.b16 %v373
      %v422 = vunpack.c.l.b16 %v374
      %v423 = vunpack.c.l.b16 %v375
      %v424 = vunpack.c.l.b16 %v376
      %v425 = vunpack.c.l.b16 %v377
      %v426 = vunpack.c.l.b16 %v378
      %v427 = vunpack.c.l.b16 %v379
      %v428 = vunpack.c.l.b16 %v380
      %v429 = vunpack.c.l.b16 %v381
      %v430 = vunpack.c.l.b16 %v382
      %v431 = vpack.c.b16 %v416, %v415
      %v432 = vpack.c.b16 %v418, %v417
      %v433 = vpack.c.b16 %v420, %v419
      %v434 = vpack.c.b16 %v422, %v421
      %v435 = vpack.c.b16 %v424, %v423
      %v436 = vpack.c.b16 %v426, %v425
      %v437 = vpack.c.b16 %v428, %v427
      %v438 = vpack.c.b16 %v430, %v429
      %447 = vmatprep.subr.bf16.mxu0 0
      %448 = vmatpush1.bf16.msra.mxu0 %v431
      %449 = vmatprep.subr.bf16.mxu0 0
      %450 = vmatpush1.bf16.msra.mxu0 %v432
      %451 = vmatprep.subr.bf16.mxu0 0
      %452 = vmatpush1.bf16.msra.mxu0 %v433
      %453 = vmatprep.subr.bf16.mxu0 0
      %454 = vmatpush1.bf16.msra.mxu0 %v434
      %455 = vmatprep.subr.bf16.mxu0 0
      %456 = vmatpush1.bf16.msra.mxu0 %v435
      %457 = vmatprep.subr.bf16.mxu0 0
      %458 = vmatpush1.bf16.msra.mxu0 %v436
      %459 = vmatprep.subr.bf16.mxu0 0
      %460 = vmatpush1.bf16.msra.mxu0 %v437
      %461 = vmatprep.subr.bf16.mxu0 0
      %462 = vmatpush1.bf16.msra.mxu0 %v438
      %463 = vmatprep.subr.bf16.mxu0 0
      %464 = vmatpush1.bf16.msra.mxu0 0
      %465 = vmatprep.subr.bf16.mxu0 0
      %466 = vmatpush1.bf16.msra.mxu0 0
      %467 = vmatprep.subr.bf16.mxu0 0
      %468 = vmatpush1.bf16.msra.mxu0 0
      %469 = vmatprep.subr.bf16.mxu0 0
      %470 = vmatpush1.bf16.msra.mxu0 0
      %471 = vmatprep.subr.bf16.mxu0 0
      %472 = vmatpush1.bf16.msra.mxu0 0
      %473 = vmatprep.subr.bf16.mxu0 0
      %474 = vmatpush1.bf16.msra.mxu0 0
      %475 = vmatprep.subr.bf16.mxu0 0
      %476 = vmatpush1.bf16.msra.mxu0 0
      %477 = vmatprep.subr.bf16.mxu0 0
      %478 = vmatpush1.bf16.msra.mxu0 0
      %479 = vmatprep.mubr.bf16.mxu0 0
      %480 = vmatmul.mubr.bf16.gmra.mrb[0].mxu0 %v391
      %v481 = vpop.f32.mrb[0].mxu0
      %v482 = vadd.f32 0.0, %v481
      %v483 = vpop.f32.mrb[0].mxu0
      %v484 = vpop.f32.mrb[0].mxu0
      %v485 = vadd.f32 0.0, %v484
      %v486 = vpop.f32.mrb[0].mxu0
      %487 = vmatprep.mubr.bf16.mxu0 0
      %488 = vmatmul.mubr.bf16.gmra.mrb[0].mxu0 %v392
      %v489 = vpop.f32.mrb[0].mxu0
      %v490 = vadd.f32 0.0, %v489
      %v491 = vpop.f32.mrb[0].mxu0
      %v492 = vpop.f32.mrb[0].mxu0
      %v493 = vadd.f32 0.0, %v492
      %v494 = vpop.f32.mrb[0].mxu0
      %495 = vmatprep.mubr.bf16.mxu0 0
      %496 = vmatmul.mubr.bf16.gmra.mrb[0].mxu0 %v393
      %v497 = vpop.f32.mrb[0].mxu0
      %v498 = vadd.f32 0.0, %v497
      %v499 = vpop.f32.mrb[0].mxu0
      %v500 = vpop.f32.mrb[0].mxu0
      %v501 = vadd.f32 0.0, %v500
      %v502 = vpop.f32.mrb[0].mxu0
      %503 = vmatprep.mubr.bf16.mxu0 0
      %504 = vmatmul.mubr.bf16.gmra.mrb[0].mxu0 %v394
      %v505 = vpop.f32.mrb[0].mxu0
      %v506 = vadd.f32 0.0, %v505
      %v507 = vpop.f32.mrb[0].mxu0
      %v508 = vpop.f32.mrb[0].mxu0
      %v509 = vadd.f32 0.0, %v508
      %v510 = vpop.f32.mrb[0].mxu0
      %511 = vdwg.mxu0
      %v520 = vunpack.c.l.b16 %v219
      %v521 = vunpack.c.l.b16 %v220
      %v522 = vunpack.c.l.b16 %v221
      %v523 = vunpack.c.l.b16 %v222
      %v524 = vunpack.c.l.b16 %v223
      %v525 = vunpack.c.l.b16 %v224
      %v526 = vunpack.c.l.b16 %v225
      %v527 = vunpack.c.l.b16 %v226
      %v528 = vpack.c.b16 %v521, %v520
      %v529 = vpack.c.b16 %v523, %v522
      %v530 = vpack.c.b16 %v525, %v524
      %v531 = vpack.c.b16 %v527, %v526
      %v552 = vunpack.c.l.b16 %v227
      %v553 = vunpack.c.l.b16 %v228
      %v554 = vunpack.c.l.b16 %v229
      %v555 = vunpack.c.l.b16 %v230
      %v556 = vunpack.c.l.b16 %v231
      %v557 = vunpack.c.l.b16 %v232
      %v558 = vunpack.c.l.b16 %v233
      %v559 = vunpack.c.l.b16 %v234
      %v560 = vunpack.c.l.b16 %v235
      %v561 = vunpack.c.l.b16 %v236
      %v562 = vunpack.c.l.b16 %v237
      %v563 = vunpack.c.l.b16 %v238
      %v564 = vunpack.c.l.b16 %v239
      %v565 = vunpack.c.l.b16 %v240
      %v566 = vunpack.c.l.b16 %v241
      %v567 = vunpack.c.l.b16 %v242
      %v568 = vpack.c.b16 %v553, %v552
      %v569 = vpack.c.b16 %v555, %v554
      %v570 = vpack.c.b16 %v557, %v556
      %v571 = vpack.c.b16 %v559, %v558
      %v572 = vpack.c.b16 %v561, %v560
      %v573 = vpack.c.b16 %v563, %v562
      %v574 = vpack.c.b16 %v565, %v564
      %v575 = vpack.c.b16 %v567, %v566
      %584 = vmatprep.subr.bf16.mxu0 0
      %585 = vmatpush1.bf16.msra.mxu0 %v568
      %586 = vmatprep.subr.bf16.mxu0 0
      %587 = vmatpush1.bf16.msra.mxu0 %v569
      %588 = vmatprep.subr.bf16.mxu0 0
      %589 = vmatpush1.bf16.msra.mxu0 %v570
      %590 = vmatprep.subr.bf16.mxu0 0
      %591 = vmatpush1.bf16.msra.mxu0 %v571
      %592 = vmatprep.subr.bf16.mxu0 0
      %593 = vmatpush1.bf16.msra.mxu0 %v572
      %594 = vmatprep.subr.bf16.mxu0 0
      %595 = vmatpush1.bf16.msra.mxu0 %v573
      %596 = vmatprep.subr.bf16.mxu0 0
      %597 = vmatpush1.bf16.msra.mxu0 %v574
      %598 = vmatprep.subr.bf16.mxu0 0
      %599 = vmatpush1.bf16.msra.mxu0 %v575
      %600 = vmatprep.subr.bf16.mxu0 0
      %601 = vmatpush1.bf16.msra.mxu0 0
      %602 = vmatprep.subr.bf16.mxu0 0
      %603 = vmatpush1.bf16.msra.mxu0 0
      %604 = vmatprep.subr.bf16.mxu0 0
      %605 = vmatpush1.bf16.msra.mxu0 0
      %606 = vmatprep.subr.bf16.mxu0 0
      %607 = vmatpush1.bf16.msra.mxu0 0
      %608 = vmatprep.subr.bf16.mxu0 0
      %609 = vmatpush1.bf16.msra.mxu0 0
      %610 = vmatprep.subr.bf16.mxu0 0
      %611 = vmatpush1.bf16.msra.mxu0 0
      %612 = vmatprep.subr.bf16.mxu0 0
      %613 = vmatpush1.bf16.msra.mxu0 0
      %614 = vmatprep.subr.bf16.mxu0 0
      %615 = vmatpush1.bf16.msra.mxu0 0
      %616 = vmatprep.mubr.bf16.mxu0 0
      %617 = vmatmul.mubr.bf16.gmra.mrb[0].mxu0 %v528
      %v618 = vpop.f32.mrb[0].mxu0
      %v619 = vadd.f32 %v482, %v618
      %v620 = vpop.f32.mrb[0].mxu0
      %v621 = vpop.f32.mrb[0].mxu0
      %v622 = vadd.f32 %v485, %v621
      %v623 = vpop.f32.mrb[0].mxu0
      %624 = vmatprep.mubr.bf16.mxu0 0
      %625 = vmatmul.mubr.bf16.gmra.mrb[0].mxu0 %v529
      %v626 = vpop.f32.mrb[0].mxu0
      %v627 = vadd.f32 %v490, %v626
      %v628 = vpop.f32.mrb[0].mxu0
      %v629 = vpop.f32.mrb[0].mxu0
      %v630 = vadd.f32 %v493, %v629
      %v631 = vpop.f32.mrb[0].mxu0
      %632 = vmatprep.mubr.bf16.mxu0 0
      %633 = vmatmul.mubr.bf16.gmra.mrb[0].mxu0 %v530
      %v634 = vpop.f32.mrb[0].mxu0
      %v635 = vadd.f32 %v498, %v634
      %v636 = vpop.f32.mrb[0].mxu0
      %v637 = vpop.f32.mrb[0].mxu0
      %v638 = vadd.f32 %v501, %v637
      %v639 = vpop.f32.mrb[0].mxu0
      %640 = vmatprep.mubr.bf16.mxu0 0
      %641 = vmatmul.mubr.bf16.gmra.mrb[0].mxu0 %v531
      %v642 = vpop.f32.mrb[0].mxu0
      %v643 = vadd.f32 %v506, %v642
      %v644 = vpop.f32.mrb[0].mxu0
      %v645 = vpop.f32.mrb[0].mxu0
      %v646 = vadd.f32 %v509, %v645
      %v647 = vpop.f32.mrb[0].mxu0
      %648 = vdwg.mxu0
      %v649 = vld [vmem:[%s207] sm:$0xe]
      %v650 = vld [vmem:[%s207 + $0x8] sm:$0xe]
      %v651 = vld [vmem:[%s207 + $0x10] sm:$0xe]
      %v652 = vld [vmem:[%s207 + $0x18] sm:$0xe]
      %v653 = vld [vmem:[%s207 + $0x20] sm:$0xe]
      %v654 = vld [vmem:[%s207 + $0x28] sm:$0xe]
      %v655 = vld [vmem:[%s207 + $0x30] sm:$0xe]
      %v656 = vld [vmem:[%s207 + $0x38] sm:$0xe]
      %vm673 = vcmask 1042432
      %vm674 = vcmask 1046532
      %vm675 = vmor %vm673, %vm674
      %v676 = vrot.slane %v649, 5
      %v677 = vrot.slane %v676, 4
      %v678 = vrot.slane %v243, 5
      %v679 = vsel %vm675, %v677, %v678
      %v680 = vrot.slane %v650, 5
      %v681 = vrot.slane %v680, 4
      %v682 = vrot.slane %v244, 5
      %v683 = vsel %vm675, %v681, %v682
      %v684 = vrot.slane %v651, 5
      %v685 = vrot.slane %v684, 4
      %v686 = vrot.slane %v245, 5
      %v687 = vsel %vm675, %v685, %v686
      %v688 = vrot.slane %v652, 5
      %v689 = vrot.slane %v688, 4
      %v690 = vrot.slane %v246, 5
      %v691 = vsel %vm675, %v689, %v690
      %v692 = vrot.slane %v653, 5
      %v693 = vrot.slane %v692, 4
      %v694 = vrot.slane %v247, 5
      %v695 = vsel %vm675, %v693, %v694
      %v696 = vrot.slane %v654, 5
      %v697 = vrot.slane %v696, 4
      %v698 = vrot.slane %v248, 5
      %v699 = vsel %vm675, %v697, %v698
      %v700 = vrot.slane %v655, 5
      %v701 = vrot.slane %v700, 4
      %v702 = vrot.slane %v249, 5
      %v703 = vsel %vm675, %v701, %v702
      %v704 = vrot.slane %v656, 5
      %v705 = vrot.slane %v704, 4
      %v706 = vrot.slane %v250, 5
      %v707 = vsel %vm675, %v705, %v706
      %s708 = scalar_lea.vmem %s1, 128
      %v709 = vld [vmem:[%s708] sm:$0xf]
      %v710 = vld [vmem:[%s708 + $0x4] sm:$0xf]
      %v711 = vld [vmem:[%s708 + $0x8] sm:$0xf]
      %v712 = vld [vmem:[%s708 + $0xc] sm:$0xf]
      %v713 = vld [vmem:[%s708 + $0x10] sm:$0xf]
      %v714 = vld [vmem:[%s708 + $0x14] sm:$0xf]
      %v715 = vld [vmem:[%s708 + $0x18] sm:$0xf]
      %v716 = vld [vmem:[%s708 + $0x1c] sm:$0xf]
      %v717 = vld [vmem:[%s708 + $0x20] sm:$0xf]
      %v718 = vld [vmem:[%s708 + $0x24] sm:$0xf]
      %v719 = vld [vmem:[%s708 + $0x28] sm:$0xf]
      %v720 = vld [vmem:[%s708 + $0x2c] sm:$0xf]
      %v721 = vld [vmem:[%s708 + $0x30] sm:$0xf]
      %v722 = vld [vmem:[%s708 + $0x34] sm:$0xf]
      %v723 = vld [vmem:[%s708 + $0x38] sm:$0xf]
      %v724 = vld [vmem:[%s708 + $0x3c] sm:$0xf]
      %v725 = vunpack.c.l.b16 %v679
      %v726 = vunpack.c.l.b16 %v683
      %v727 = vunpack.c.l.b16 %v687
      %v728 = vunpack.c.l.b16 %v691
      %v729 = vunpack.c.l.b16 %v695
      %v730 = vunpack.c.l.b16 %v699
      %v731 = vunpack.c.l.b16 %v703
      %v732 = vunpack.c.l.b16 %v707
      %v733 = vpack.c.b16 %v726, %v725
      %v734 = vpack.c.b16 %v728, %v727
      %v735 = vpack.c.b16 %v730, %v729
      %v736 = vpack.c.b16 %v732, %v731
      %v757 = vunpack.c.l.b16 %v709
      %v758 = vunpack.c.l.b16 %v710
      %v759 = vunpack.c.l.b16 %v711
      %v760 = vunpack.c.l.b16 %v712
      %v761 = vunpack.c.l.b16 %v713
      %v762 = vunpack.c.l.b16 %v714
      %v763 = vunpack.c.l.b16 %v715
      %v764 = vunpack.c.l.b16 %v716
      %v765 = vunpack.c.l.b16 %v717
      %v766 = vunpack.c.l.b16 %v718
      %v767 = vunpack.c.l.b16 %v719
      %v768 = vunpack.c.l.b16 %v720
      %v769 = vunpack.c.l.b16 %v721
      %v770 = vunpack.c.l.b16 %v722
      %v771 = vunpack.c.l.b16 %v723
      %v772 = vunpack.c.l.b16 %v724
      %v773 = vpack.c.b16 %v758, %v757
      %v774 = vpack.c.b16 %v760, %v759
      %v775 = vpack.c.b16 %v762, %v761
      %v776 = vpack.c.b16 %v764, %v763
      %v777 = vpack.c.b16 %v766, %v765
      %v778 = vpack.c.b16 %v768, %v767
      %v779 = vpack.c.b16 %v770, %v769
      %v780 = vpack.c.b16 %v772, %v771
      %789 = vmatprep.subr.bf16.mxu0 0
      %790 = vmatpush1.bf16.msra.mxu0 %v773
      %791 = vmatprep.subr.bf16.mxu0 0
      %792 = vmatpush1.bf16.msra.mxu0 %v774
      %793 = vmatprep.subr.bf16.mxu0 0
      %794 = vmatpush1.bf16.msra.mxu0 %v775
      %795 = vmatprep.subr.bf16.mxu0 0
      %796 = vmatpush1.bf16.msra.mxu0 %v776
      %797 = vmatprep.subr.bf16.mxu0 0
      %798 = vmatpush1.bf16.msra.mxu0 %v777
      %799 = vmatprep.subr.bf16.mxu0 0
      %800 = vmatpush1.bf16.msra.mxu0 %v778
      %801 = vmatprep.subr.bf16.mxu0 0
      %802 = vmatpush1.bf16.msra.mxu0 %v779
      %803 = vmatprep.subr.bf16.mxu0 0
      %804 = vmatpush1.bf16.msra.mxu0 %v780
      %805 = vmatprep.subr.bf16.mxu0 0
      %806 = vmatpush1.bf16.msra.mxu0 0
      %807 = vmatprep.subr.bf16.mxu0 0
      %808 = vmatpush1.bf16.msra.mxu0 0
      %809 = vmatprep.subr.bf16.mxu0 0
      %810 = vmatpush1.bf16.msra.mxu0 0
      %811 = vmatprep.subr.bf16.mxu0 0
      %812 = vmatpush1.bf16.msra.mxu0 0
      %813 = vmatprep.subr.bf16.mxu0 0
      %814 = vmatpush1.bf16.msra.mxu0 0
      %815 = vmatprep.subr.bf16.mxu0 0
      %816 = vmatpush1.bf16.msra.mxu0 0
      %817 = vmatprep.subr.bf16.mxu0 0
      %818 = vmatpush1.bf16.msra.mxu0 0
      %819 = vmatprep.subr.bf16.mxu0 0
      %820 = vmatpush1.bf16.msra.mxu0 0
      %821 = vmatprep.mubr.bf16.mxu0 0
      %822 = vmatmul.mubr.bf16.gmra.mrb[0].mxu0 %v733
      %v823 = vpop.f32.mrb[0].mxu0
      %v824 = vadd.f32 0.0, %v823
      %v825 = vpop.f32.mrb[0].mxu0
      %v826 = vpop.f32.mrb[0].mxu0
      %v827 = vadd.f32 0.0, %v826
      %v828 = vpop.f32.mrb[0].mxu0
      %829 = vmatprep.mubr.bf16.mxu0 0
      %830 = vmatmul.mubr.bf16.gmra.mrb[0].mxu0 %v734
      %v831 = vpop.f32.mrb[0].mxu0
      %v832 = vadd.f32 0.0, %v831
      %v833 = vpop.f32.mrb[0].mxu0
      %v834 = vpop.f32.mrb[0].mxu0
      %v835 = vadd.f32 0.0, %v834
      %v836 = vpop.f32.mrb[0].mxu0
      %837 = vmatprep.mubr.bf16.mxu0 0
      %838 = vmatmul.mubr.bf16.gmra.mrb[0].mxu0 %v735
      %v839 = vpop.f32.mrb[0].mxu0
      %v840 = vadd.f32 0.0, %v839
      %v841 = vpop.f32.mrb[0].mxu0
      %v842 = vpop.f32.mrb[0].mxu0
      %v843 = vadd.f32 0.0, %v842
      %v844 = vpop.f32.mrb[0].mxu0
      %845 = vmatprep.mubr.bf16.mxu0 0
      %846 = vmatmul.mubr.bf16.gmra.mrb[0].mxu0 %v736
      %v847 = vpop.f32.mrb[0].mxu0
      %v848 = vadd.f32 0.0, %v847
      %v849 = vpop.f32.mrb[0].mxu0
      %v850 = vpop.f32.mrb[0].mxu0
      %v851 = vadd.f32 0.0, %v850
      %v852 = vpop.f32.mrb[0].mxu0
      %853 = vdwg.mxu0
      %v854 = vadd.f32 %v619, %v824
      %v855 = vadd.f32 %v622, %v827
      %v856 = vadd.f32 %v627, %v832
      %v857 = vadd.f32 %v630, %v835
      %v858 = vadd.f32 %v635, %v840
      %v859 = vadd.f32 %v638, %v843
      %v860 = vadd.f32 %v643, %v848
      %v861 = vadd.f32 %v646, %v851
      %s862 = scalar_lea.vmem %s207, 8
      %v863 = vld [vmem:[%s862] sm:$0xf]
      %v864 = vld [vmem:[%s862 + $0x8] sm:$0xf]
      %v865 = vld [vmem:[%s862 + $0x10] sm:$0xf]
      %v866 = vld [vmem:[%s862 + $0x18] sm:$0xf]
      %v867 = vld [vmem:[%s862 + $0x20] sm:$0xf]
      %v868 = vld [vmem:[%s862 + $0x28] sm:$0xf]
      %v869 = vld [vmem:[%s862 + $0x30] sm:$0xf]
      %v870 = vld [vmem:[%s862 + $0x38] sm:$0xf]
      %s871 = scalar_lea.vmem %s1, 192
      %v872 = vld [vmem:[%s871] sm:$0xf]
      %v873 = vld [vmem:[%s871 + $0x4] sm:$0xf]
      %v874 = vld [vmem:[%s871 + $0x8] sm:$0xf]
      %v875 = vld [vmem:[%s871 + $0xc] sm:$0xf]
      %v876 = vld [vmem:[%s871 + $0x10] sm:$0xf]
      %v877 = vld [vmem:[%s871 + $0x14] sm:$0xf]
      %v878 = vld [vmem:[%s871 + $0x18] sm:$0xf]
      %v879 = vld [vmem:[%s871 + $0x1c] sm:$0xf]
      %v880 = vld [vmem:[%s871 + $0x20] sm:$0xf]
      %v881 = vld [vmem:[%s871 + $0x24] sm:$0xf]
      %v882 = vld [vmem:[%s871 + $0x28] sm:$0xf]
      %v883 = vld [vmem:[%s871 + $0x2c] sm:$0xf]
      %v884 = vld [vmem:[%s871 + $0x30] sm:$0xf]
      %v885 = vld [vmem:[%s871 + $0x34] sm:$0xf]
      %v886 = vld [vmem:[%s871 + $0x38] sm:$0xf]
      %v887 = vld [vmem:[%s871 + $0x3c] sm:$0xf]
      %v896 = vunpack.c.l.b16 %v863
      %v897 = vunpack.c.l.b16 %v864
      %v898 = vunpack.c.l.b16 %v865
      %v899 = vunpack.c.l.b16 %v866
      %v900 = vunpack.c.l.b16 %v867
      %v901 = vunpack.c.l.b16 %v868
      %v902 = vunpack.c.l.b16 %v869
      %v903 = vunpack.c.l.b16 %v870
      %v904 = vpack.c.b16 %v897, %v896
      %v905 = vpack.c.b16 %v899, %v898
      %v906 = vpack.c.b16 %v901, %v900
      %v907 = vpack.c.b16 %v903, %v902
      %v928 = vunpack.c.l.b16 %v872
      %v929 = vunpack.c.l.b16 %v873
      %v930 = vunpack.c.l.b16 %v874
      %v931 = vunpack.c.l.b16 %v875
      %v932 = vunpack.c.l.b16 %v876
      %v933 = vunpack.c.l.b16 %v877
      %v934 = vunpack.c.l.b16 %v878
      %v935 = vunpack.c.l.b16 %v879
      %v936 = vunpack.c.l.b16 %v880
      %v937 = vunpack.c.l.b16 %v881
      %v938 = vunpack.c.l.b16 %v882
      %v939 = vunpack.c.l.b16 %v883
      %v940 = vunpack.c.l.b16 %v884
      %v941 = vunpack.c.l.b16 %v885
      %v942 = vunpack.c.l.b16 %v886
      %v943 = vunpack.c.l.b16 %v887
      %v944 = vpack.c.b16 %v929, %v928
      %v945 = vpack.c.b16 %v931, %v930
      %v946 = vpack.c.b16 %v933, %v932
      %v947 = vpack.c.b16 %v935, %v934
      %v948 = vpack.c.b16 %v937, %v936
      %v949 = vpack.c.b16 %v939, %v938
      %v950 = vpack.c.b16 %v941, %v940
      %v951 = vpack.c.b16 %v943, %v942
      %960 = vmatprep.subr.bf16.mxu0 0
      %961 = vmatpush1.bf16.msra.mxu0 %v944
      %962 = vmatprep.subr.bf16.mxu0 0
      %963 = vmatpush1.bf16.msra.mxu0 %v945
      %964 = vmatprep.subr.bf16.mxu0 0
      %965 = vmatpush1.bf16.msra.mxu0 %v946
      %966 = vmatprep.subr.bf16.mxu0 0
      %967 = vmatpush1.bf16.msra.mxu0 %v947
      %968 = vmatprep.subr.bf16.mxu0 0
      %969 = vmatpush1.bf16.msra.mxu0 %v948
      %970 = vmatprep.subr.bf16.mxu0 0
      %971 = vmatpush1.bf16.msra.mxu0 %v949
      %972 = vmatprep.subr.bf16.mxu0 0
      %973 = vmatpush1.bf16.msra.mxu0 %v950
      %974 = vmatprep.subr.bf16.mxu0 0
      %975 = vmatpush1.bf16.msra.mxu0 %v951
      %976 = vmatprep.subr.bf16.mxu0 0
      %977 = vmatpush1.bf16.msra.mxu0 0
      %978 = vmatprep.subr.bf16.mxu0 0
      %979 = vmatpush1.bf16.msra.mxu0 0
      %980 = vmatprep.subr.bf16.mxu0 0
      %981 = vmatpush1.bf16.msra.mxu0 0
      %982 = vmatprep.subr.bf16.mxu0 0
      %983 = vmatpush1.bf16.msra.mxu0 0
      %984 = vmatprep.subr.bf16.mxu0 0
      %985 = vmatpush1.bf16.msra.mxu0 0
      %986 = vmatprep.subr.bf16.mxu0 0
      %987 = vmatpush1.bf16.msra.mxu0 0
      %988 = vmatprep.subr.bf16.mxu0 0
      %989 = vmatpush1.bf16.msra.mxu0 0
      %990 = vmatprep.subr.bf16.mxu0 0
      %991 = vmatpush1.bf16.msra.mxu0 0
      %992 = vmatprep.mubr.bf16.mxu0 0
      %993 = vmatmul.mubr.bf16.gmra.mrb[0].mxu0 %v904
      %v994 = vpop.f32.mrb[0].mxu0
      %v995 = vadd.f32 0.0, %v994
      %v996 = vpop.f32.mrb[0].mxu0
      %v997 = vpop.f32.mrb[0].mxu0
      %v998 = vadd.f32 0.0, %v997
      %v999 = vpop.f32.mrb[0].mxu0
      %1000 = vmatprep.mubr.bf16.mxu0 0
      %1001 = vmatmul.mubr.bf16.gmra.mrb[0].mxu0 %v905
      %v1002 = vpop.f32.mrb[0].mxu0
      %v1003 = vadd.f32 0.0, %v1002
      %v1004 = vpop.f32.mrb[0].mxu0
      %v1005 = vpop.f32.mrb[0].mxu0
      %v1006 = vadd.f32 0.0, %v1005
      %v1007 = vpop.f32.mrb[0].mxu0
      %1008 = vmatprep.mubr.bf16.mxu0 0
      %1009 = vmatmul.mubr.bf16.gmra.mrb[0].mxu0 %v906
      %v1010 = vpop.f32.mrb[0].mxu0
      %v1011 = vadd.f32 0.0, %v1010
      %v1012 = vpop.f32.mrb[0].mxu0
      %v1013 = vpop.f32.mrb[0].mxu0
      %v1014 = vadd.f32 0.0, %v1013
      %v1015 = vpop.f32.mrb[0].mxu0
      %1016 = vmatprep.mubr.bf16.mxu0 0
      %1017 = vmatmul.mubr.bf16.gmra.mrb[0].mxu0 %v907
      %v1018 = vpop.f32.mrb[0].mxu0
      %v1019 = vadd.f32 0.0, %v1018
      %v1020 = vpop.f32.mrb[0].mxu0
      %v1021 = vpop.f32.mrb[0].mxu0
      %v1022 = vadd.f32 0.0, %v1021
      %v1023 = vpop.f32.mrb[0].mxu0
      %1024 = vdwg.mxu0
      %v1025 = vadd.f32 %v854, %v995
      %v1026 = vadd.f32 %v855, %v998
      %v1027 = vadd.f32 %v856, %v1003
      %v1028 = vadd.f32 %v857, %v1006
      %v1029 = vadd.f32 %v858, %v1011
      %v1030 = vadd.f32 %v859, %v1014
      %v1031 = vadd.f32 %v860, %v1019
      %v1032 = vadd.f32 %v861, %v1022
      %v1033 = vld [vmem:[%s862] sm:$0xf]
      %v1034 = vld [vmem:[%s862 + $0x4] sm:$0x1]
      %v1035 = vld [vmem:[%s862 + $0x8] sm:$0xf]
      %v1036 = vld [vmem:[%s862 + $0xc] sm:$0x1]
      %v1037 = vld [vmem:[%s862 + $0x10] sm:$0xf]
      %v1038 = vld [vmem:[%s862 + $0x14] sm:$0x1]
      %v1039 = vld [vmem:[%s862 + $0x18] sm:$0xf]
      %v1040 = vld [vmem:[%s862 + $0x1c] sm:$0x1]
      %v1041 = vld [vmem:[%s862 + $0x20] sm:$0xf]
      %v1042 = vld [vmem:[%s862 + $0x24] sm:$0x1]
      %v1043 = vld [vmem:[%s862 + $0x28] sm:$0xf]
      %v1044 = vld [vmem:[%s862 + $0x2c] sm:$0x1]
      %v1045 = vld [vmem:[%s862 + $0x30] sm:$0xf]
      %v1046 = vld [vmem:[%s862 + $0x34] sm:$0x1]
      %v1047 = vld [vmem:[%s862 + $0x38] sm:$0xf]
      %v1048 = vld [vmem:[%s862 + $0x3c] sm:$0x1]
      %v1050 = vshrl.u32 %v1033, 16
      %v1052 = vrot.slane %v1050, 4
      %v1053 = vshll.u32 %v1033, 16
      %v1055 = vrot.slane %v1053, 5
      %v1056 = vor.u32 %v1052, %v1055
      %v1057 = vrot.slane %v1056, 4
      %v1059 = vshll.u32 %v1034, 16
      %v1061 = vrot.slane %v1059, 5
      %v1062 = vsel %vm253, %v1057, %v1061
      %v1064 = vshrl.u32 %v1035, 16
      %v1066 = vrot.slane %v1064, 4
      %v1067 = vshll.u32 %v1035, 16
      %v1069 = vrot.slane %v1067, 5
      %v1070 = vor.u32 %v1066, %v1069
      %v1071 = vrot.slane %v1070, 4
      %v1073 = vshll.u32 %v1036, 16
      %v1075 = vrot.slane %v1073, 5
      %v1076 = vsel %vm253, %v1071, %v1075
      %v1078 = vshrl.u32 %v1037, 16
      %v1080 = vrot.slane %v1078, 4
      %v1081 = vshll.u32 %v1037, 16
      %v1083 = vrot.slane %v1081, 5
      %v1084 = vor.u32 %v1080, %v1083
      %v1085 = vrot.slane %v1084, 4
      %v1087 = vshll.u32 %v1038, 16
      %v1089 = vrot.slane %v1087, 5
      %v1090 = vsel %vm253, %v1085, %v1089
      %v1092 = vshrl.u32 %v1039, 16
      %v1094 = vrot.slane %v1092, 4
      %v1095 = vshll.u32 %v1039, 16
      %v1097 = vrot.slane %v1095, 5
      %v1098 = vor.u32 %v1094, %v1097
      %v1099 = vrot.slane %v1098, 4
      %v1101 = vshll.u32 %v1040, 16
      %v1103 = vrot.slane %v1101, 5
      %v1104 = vsel %vm253, %v1099, %v1103
      %v1106 = vshrl.u32 %v1041, 16
      %v1108 = vrot.slane %v1106, 4
      %v1109 = vshll.u32 %v1041, 16
      %v1111 = vrot.slane %v1109, 5
      %v1112 = vor.u32 %v1108, %v1111
      %v1113 = vrot.slane %v1112, 4
      %v1115 = vshll.u32 %v1042, 16
      %v1117 = vrot.slane %v1115, 5
      %v1118 = vsel %vm253, %v1113, %v1117
      %v1120 = vshrl.u32 %v1043, 16
      %v1122 = vrot.slane %v1120, 4
      %v1123 = vshll.u32 %v1043, 16
      %v1125 = vrot.slane %v1123, 5
      %v1126 = vor.u32 %v1122, %v1125
      %v1127 = vrot.slane %v1126, 4
      %v1129 = vshll.u32 %v1044, 16
      %v1131 = vrot.slane %v1129, 5
      %v1132 = vsel %vm253, %v1127, %v1131
      %v1134 = vshrl.u32 %v1045, 16
      %v1136 = vrot.slane %v1134, 4
      %v1137 = vshll.u32 %v1045, 16
      %v1139 = vrot.slane %v1137, 5
      %v1140 = vor.u32 %v1136, %v1139
      %v1141 = vrot.slane %v1140, 4
      %v1143 = vshll.u32 %v1046, 16
      %v1145 = vrot.slane %v1143, 5
      %v1146 = vsel %vm253, %v1141, %v1145
      %v1148 = vshrl.u32 %v1047, 16
      %v1150 = vrot.slane %v1148, 4
      %v1151 = vshll.u32 %v1047, 16
      %v1153 = vrot.slane %v1151, 5
      %v1154 = vor.u32 %v1150, %v1153
      %v1155 = vrot.slane %v1154, 4
      %v1157 = vshll.u32 %v1048, 16
      %v1159 = vrot.slane %v1157, 5
      %v1160 = vsel %vm253, %v1155, %v1159
      %s1161 = scalar_lea.vmem %s1, 256
      %v1162 = vld [vmem:[%s1161] sm:$0xf]
      %v1163 = vld [vmem:[%s1161 + $0x4] sm:$0xf]
      %v1164 = vld [vmem:[%s1161 + $0x8] sm:$0xf]
      %v1165 = vld [vmem:[%s1161 + $0xc] sm:$0xf]
      %v1166 = vld [vmem:[%s1161 + $0x10] sm:$0xf]
      %v1167 = vld [vmem:[%s1161 + $0x14] sm:$0xf]
      %v1168 = vld [vmem:[%s1161 + $0x18] sm:$0xf]
      %v1169 = vld [vmem:[%s1161 + $0x1c] sm:$0xf]
      %v1170 = vld [vmem:[%s1161 + $0x20] sm:$0xf]
      %v1171 = vld [vmem:[%s1161 + $0x24] sm:$0xf]
      %v1172 = vld [vmem:[%s1161 + $0x28] sm:$0xf]
      %v1173 = vld [vmem:[%s1161 + $0x2c] sm:$0xf]
      %v1174 = vld [vmem:[%s1161 + $0x30] sm:$0xf]
      %v1175 = vld [vmem:[%s1161 + $0x34] sm:$0xf]
      %v1176 = vld [vmem:[%s1161 + $0x38] sm:$0xf]
      %v1177 = vld [vmem:[%s1161 + $0x3c] sm:$0xf]
      %v1178 = vunpack.c.l.b16 %v1062
      %v1179 = vunpack.c.l.b16 %v1076
      %v1180 = vunpack.c.l.b16 %v1090
      %v1181 = vunpack.c.l.b16 %v1104
      %v1182 = vunpack.c.l.b16 %v1118
      %v1183 = vunpack.c.l.b16 %v1132
      %v1184 = vunpack.c.l.b16 %v1146
      %v1185 = vunpack.c.l.b16 %v1160
      %v1186 = vpack.c.b16 %v1179, %v1178
      %v1187 = vpack.c.b16 %v1181, %v1180
      %v1188 = vpack.c.b16 %v1183, %v1182
      %v1189 = vpack.c.b16 %v1185, %v1184
      %v1210 = vunpack.c.l.b16 %v1162
      %v1211 = vunpack.c.l.b16 %v1163
      %v1212 = vunpack.c.l.b16 %v1164
      %v1213 = vunpack.c.l.b16 %v1165
      %v1214 = vunpack.c.l.b16 %v1166
      %v1215 = vunpack.c.l.b16 %v1167
      %v1216 = vunpack.c.l.b16 %v1168
      %v1217 = vunpack.c.l.b16 %v1169
      %v1218 = vunpack.c.l.b16 %v1170
      %v1219 = vunpack.c.l.b16 %v1171
      %v1220 = vunpack.c.l.b16 %v1172
      %v1221 = vunpack.c.l.b16 %v1173
      %v1222 = vunpack.c.l.b16 %v1174
      %v1223 = vunpack.c.l.b16 %v1175
      %v1224 = vunpack.c.l.b16 %v1176
      %v1225 = vunpack.c.l.b16 %v1177
      %v1226 = vpack.c.b16 %v1211, %v1210
      %v1227 = vpack.c.b16 %v1213, %v1212
      %v1228 = vpack.c.b16 %v1215, %v1214
      %v1229 = vpack.c.b16 %v1217, %v1216
      %v1230 = vpack.c.b16 %v1219, %v1218
      %v1231 = vpack.c.b16 %v1221, %v1220
      %v1232 = vpack.c.b16 %v1223, %v1222
      %v1233 = vpack.c.b16 %v1225, %v1224
      %1242 = vmatprep.subr.bf16.mxu0 0
      %1243 = vmatpush1.bf16.msra.mxu0 %v1226
      %1244 = vmatprep.subr.bf16.mxu0 0
      %1245 = vmatpush1.bf16.msra.mxu0 %v1227
      %1246 = vmatprep.subr.bf16.mxu0 0
      %1247 = vmatpush1.bf16.msra.mxu0 %v1228
      %1248 = vmatprep.subr.bf16.mxu0 0
      %1249 = vmatpush1.bf16.msra.mxu0 %v1229
      %1250 = vmatprep.subr.bf16.mxu0 0
      %1251 = vmatpush1.bf16.msra.mxu0 %v1230
      %1252 = vmatprep.subr.bf16.mxu0 0
      %1253 = vmatpush1.bf16.msra.mxu0 %v1231
      %1254 = vmatprep.subr.bf16.mxu0 0
      %1255 = vmatpush1.bf16.msra.mxu0 %v1232
      %1256 = vmatprep.subr.bf16.mxu0 0
      %1257 = vmatpush1.bf16.msra.mxu0 %v1233
      %1258 = vmatprep.subr.bf16.mxu0 0
      %1259 = vmatpush1.bf16.msra.mxu0 0
      %1260 = vmatprep.subr.bf16.mxu0 0
      %1261 = vmatpush1.bf16.msra.mxu0 0
      %1262 = vmatprep.subr.bf16.mxu0 0
      %1263 = vmatpush1.bf16.msra.mxu0 0
      %1264 = vmatprep.subr.bf16.mxu0 0
      %1265 = vmatpush1.bf16.msra.mxu0 0
      %1266 = vmatprep.subr.bf16.mxu0 0
      %1267 = vmatpush1.bf16.msra.mxu0 0
      %1268 = vmatprep.subr.bf16.mxu0 0
      %1269 = vmatpush1.bf16.msra.mxu0 0
      %1270 = vmatprep.subr.bf16.mxu0 0
      %1271 = vmatpush1.bf16.msra.mxu0 0
      %1272 = vmatprep.subr.bf16.mxu0 0
      %1273 = vmatpush1.bf16.msra.mxu0 0
      %1274 = vmatprep.mubr.bf16.mxu0 0
      %1275 = vmatmul.mubr.bf16.gmra.mrb[0].mxu0 %v1186
      %v1276 = vpop.f32.mrb[0].mxu0
      %v1277 = vadd.f32 0.0, %v1276
      %v1278 = vpop.f32.mrb[0].mxu0
      %v1279 = vpop.f32.mrb[0].mxu0
      %v1280 = vadd.f32 0.0, %v1279
      %v1281 = vpop.f32.mrb[0].mxu0
      %1282 = vmatprep.mubr.bf16.mxu0 0
      %1283 = vmatmul.mubr.bf16.gmra.mrb[0].mxu0 %v1187
      %v1284 = vpop.f32.mrb[0].mxu0
      %v1285 = vadd.f32 0.0, %v1284
      %v1286 = vpop.f32.mrb[0].mxu0
      %v1287 = vpop.f32.mrb[0].mxu0
      %v1288 = vadd.f32 0.0, %v1287
      %v1289 = vpop.f32.mrb[0].mxu0
      %1290 = vmatprep.mubr.bf16.mxu0 0
      %1291 = vmatmul.mubr.bf16.gmra.mrb[0].mxu0 %v1188
      %v1292 = vpop.f32.mrb[0].mxu0
      %v1293 = vadd.f32 0.0, %v1292
      %v1294 = vpop.f32.mrb[0].mxu0
      %v1295 = vpop.f32.mrb[0].mxu0
      %v1296 = vadd.f32 0.0, %v1295
      %v1297 = vpop.f32.mrb[0].mxu0
      %1298 = vmatprep.mubr.bf16.mxu0 0
      %1299 = vmatmul.mubr.bf16.gmra.mrb[0].mxu0 %v1189
      %v1300 = vpop.f32.mrb[0].mxu0
      %v1301 = vadd.f32 0.0, %v1300
      %v1302 = vpop.f32.mrb[0].mxu0
      %v1303 = vpop.f32.mrb[0].mxu0
      %v1304 = vadd.f32 0.0, %v1303
      %v1305 = vpop.f32.mrb[0].mxu0
      %1306 = vdwg.mxu0
      %v1307 = vadd.f32 %v1025, %v1277
      %v1308 = vadd.f32 %v1026, %v1280
      %v1309 = vadd.f32 %v1027, %v1285
      %v1310 = vadd.f32 %v1028, %v1288
      %v1311 = vadd.f32 %v1029, %v1293
      %v1312 = vadd.f32 %v1030, %v1296
      %v1313 = vadd.f32 %v1031, %v1301
      %v1314 = vadd.f32 %v1032, %v1304
      %v1315 = vld [vmem:[%s862] sm:$0xe]
      %v1316 = vld [vmem:[%s862 + $0x8] sm:$0xe]
      %v1317 = vld [vmem:[%s862 + $0x10] sm:$0xe]
      %v1318 = vld [vmem:[%s862 + $0x18] sm:$0xe]
      %v1319 = vld [vmem:[%s862 + $0x20] sm:$0xe]
      %v1320 = vld [vmem:[%s862 + $0x28] sm:$0xe]
      %v1321 = vld [vmem:[%s862 + $0x30] sm:$0xe]
      %v1322 = vld [vmem:[%s862 + $0x38] sm:$0xe]
      %v1339 = vrot.slane %v1315, 5
      %v1340 = vrot.slane %v1339, 4
      %v1341 = vrot.slane %v1034, 5
      %v1342 = vsel %vm675, %v1340, %v1341
      %v1343 = vrot.slane %v1316, 5
      %v1344 = vrot.slane %v1343, 4
      %v1345 = vrot.slane %v1036, 5
      %v1346 = vsel %vm675, %v1344, %v1345
      %v1347 = vrot.slane %v1317, 5
      %v1348 = vrot.slane %v1347, 4
      %v1349 = vrot.slane %v1038, 5
      %v1350 = vsel %vm675, %v1348, %v1349
      %v1351 = vrot.slane %v1318, 5
      %v1352 = vrot.slane %v1351, 4
      %v1353 = vrot.slane %v1040, 5
      %v1354 = vsel %vm675, %v1352, %v1353
      %v1355 = vrot.slane %v1319, 5
      %v1356 = vrot.slane %v1355, 4
      %v1357 = vrot.slane %v1042, 5
      %v1358 = vsel %vm675, %v1356, %v1357
      %v1359 = vrot.slane %v1320, 5
      %v1360 = vrot.slane %v1359, 4
      %v1361 = vrot.slane %v1044, 5
      %v1362 = vsel %vm675, %v1360, %v1361
      %v1363 = vrot.slane %v1321, 5
      %v1364 = vrot.slane %v1363, 4
      %v1365 = vrot.slane %v1046, 5
      %v1366 = vsel %vm675, %v1364, %v1365
      %v1367 = vrot.slane %v1322, 5
      %v1368 = vrot.slane %v1367, 4
      %v1369 = vrot.slane %v1048, 5
      %v1370 = vsel %vm675, %v1368, %v1369
      %s1371 = scalar_lea.vmem %s1, 320
      %v1372 = vld [vmem:[%s1371] sm:$0xf]
      %v1373 = vld [vmem:[%s1371 + $0x4] sm:$0xf]
      %v1374 = vld [vmem:[%s1371 + $0x8] sm:$0xf]
      %v1375 = vld [vmem:[%s1371 + $0xc] sm:$0xf]
      %v1376 = vld [vmem:[%s1371 + $0x10] sm:$0xf]
      %v1377 = vld [vmem:[%s1371 + $0x14] sm:$0xf]
      %v1378 = vld [vmem:[%s1371 + $0x18] sm:$0xf]
      %v1379 = vld [vmem:[%s1371 + $0x1c] sm:$0xf]
      %v1380 = vld [vmem:[%s1371 + $0x20] sm:$0xf]
      %v1381 = vld [vmem:[%s1371 + $0x24] sm:$0xf]
      %v1382 = vld [vmem:[%s1371 + $0x28] sm:$0xf]
      %v1383 = vld [vmem:[%s1371 + $0x2c] sm:$0xf]
      %v1384 = vld [vmem:[%s1371 + $0x30] sm:$0xf]
      %v1385 = vld [vmem:[%s1371 + $0x34] sm:$0xf]
      %v1386 = vld [vmem:[%s1371 + $0x38] sm:$0xf]
      %v1387 = vld [vmem:[%s1371 + $0x3c] sm:$0xf]
      %v1388 = vunpack.c.l.b16 %v1342
      %v1389 = vunpack.c.l.b16 %v1346
      %v1390 = vunpack.c.l.b16 %v1350
      %v1391 = vunpack.c.l.b16 %v1354
      %v1392 = vunpack.c.l.b16 %v1358
      %v1393 = vunpack.c.l.b16 %v1362
      %v1394 = vunpack.c.l.b16 %v1366
      %v1395 = vunpack.c.l.b16 %v1370
      %v1396 = vpack.c.b16 %v1389, %v1388
      %v1397 = vpack.c.b16 %v1391, %v1390
      %v1398 = vpack.c.b16 %v1393, %v1392
      %v1399 = vpack.c.b16 %v1395, %v1394
      %v1420 = vunpack.c.l.b16 %v1372
      %v1421 = vunpack.c.l.b16 %v1373
      %v1422 = vunpack.c.l.b16 %v1374
      %v1423 = vunpack.c.l.b16 %v1375
      %v1424 = vunpack.c.l.b16 %v1376
      %v1425 = vunpack.c.l.b16 %v1377
      %v1426 = vunpack.c.l.b16 %v1378
      %v1427 = vunpack.c.l.b16 %v1379
      %v1428 = vunpack.c.l.b16 %v1380
      %v1429 = vunpack.c.l.b16 %v1381
      %v1430 = vunpack.c.l.b16 %v1382
      %v1431 = vunpack.c.l.b16 %v1383
      %v1432 = vunpack.c.l.b16 %v1384
      %v1433 = vunpack.c.l.b16 %v1385
      %v1434 = vunpack.c.l.b16 %v1386
      %v1435 = vunpack.c.l.b16 %v1387
      %v1436 = vpack.c.b16 %v1421, %v1420
      %v1437 = vpack.c.b16 %v1423, %v1422
      %v1438 = vpack.c.b16 %v1425, %v1424
      %v1439 = vpack.c.b16 %v1427, %v1426
      %v1440 = vpack.c.b16 %v1429, %v1428
      %v1441 = vpack.c.b16 %v1431, %v1430
      %v1442 = vpack.c.b16 %v1433, %v1432
      %v1443 = vpack.c.b16 %v1435, %v1434
      %1452 = vmatprep.subr.bf16.mxu0 0
      %1453 = vmatpush1.bf16.msra.mxu0 %v1436
      %1454 = vmatprep.subr.bf16.mxu0 0
      %1455 = vmatpush1.bf16.msra.mxu0 %v1437
      %1456 = vmatprep.subr.bf16.mxu0 0
      %1457 = vmatpush1.bf16.msra.mxu0 %v1438
      %1458 = vmatprep.subr.bf16.mxu0 0
      %1459 = vmatpush1.bf16.msra.mxu0 %v1439
      %1460 = vmatprep.subr.bf16.mxu0 0
      %1461 = vmatpush1.bf16.msra.mxu0 %v1440
      %1462 = vmatprep.subr.bf16.mxu0 0
      %1463 = vmatpush1.bf16.msra.mxu0 %v1441
      %1464 = vmatprep.subr.bf16.mxu0 0
      %1465 = vmatpush1.bf16.msra.mxu0 %v1442
      %1466 = vmatprep.subr.bf16.mxu0 0
      %1467 = vmatpush1.bf16.msra.mxu0 %v1443
      %1468 = vmatprep.subr.bf16.mxu0 0
      %1469 = vmatpush1.bf16.msra.mxu0 0
      %1470 = vmatprep.subr.bf16.mxu0 0
      %1471 = vmatpush1.bf16.msra.mxu0 0
      %1472 = vmatprep.subr.bf16.mxu0 0
      %1473 = vmatpush1.bf16.msra.mxu0 0
      %1474 = vmatprep.subr.bf16.mxu0 0
      %1475 = vmatpush1.bf16.msra.mxu0 0
      %1476 = vmatprep.subr.bf16.mxu0 0
      %1477 = vmatpush1.bf16.msra.mxu0 0
      %1478 = vmatprep.subr.bf16.mxu0 0
      %1479 = vmatpush1.bf16.msra.mxu0 0
      %1480 = vmatprep.subr.bf16.mxu0 0
      %1481 = vmatpush1.bf16.msra.mxu0 0
      %1482 = vmatprep.subr.bf16.mxu0 0
      %1483 = vmatpush1.bf16.msra.mxu0 0
      %1484 = vmatprep.mubr.bf16.mxu0 0
      %1485 = vmatmul.mubr.bf16.gmra.mrb[0].mxu0 %v1396
      %v1486 = vpop.f32.mrb[0].mxu0
      %v1487 = vadd.f32 0.0, %v1486
      %v1488 = vpop.f32.mrb[0].mxu0
      %v1489 = vpop.f32.mrb[0].mxu0
      %v1490 = vadd.f32 0.0, %v1489
      %v1491 = vpop.f32.mrb[0].mxu0
      %1492 = vmatprep.mubr.bf16.mxu0 0
      %1493 = vmatmul.mubr.bf16.gmra.mrb[0].mxu0 %v1397
      %v1494 = vpop.f32.mrb[0].mxu0
      %v1495 = vadd.f32 0.0, %v1494
      %v1496 = vpop.f32.mrb[0].mxu0
      %v1497 = vpop.f32.mrb[0].mxu0
      %v1498 = vadd.f32 0.0, %v1497
      %v1499 = vpop.f32.mrb[0].mxu0
      %1500 = vmatprep.mubr.bf16.mxu0 0
      %1501 = vmatmul.mubr.bf16.gmra.mrb[0].mxu0 %v1398
      %v1502 = vpop.f32.mrb[0].mxu0
      %v1503 = vadd.f32 0.0, %v1502
      %v1504 = vpop.f32.mrb[0].mxu0
      %v1505 = vpop.f32.mrb[0].mxu0
      %v1506 = vadd.f32 0.0, %v1505
      %v1507 = vpop.f32.mrb[0].mxu0
      %1508 = vmatprep.mubr.bf16.mxu0 0
      %1509 = vmatmul.mubr.bf16.gmra.mrb[0].mxu0 %v1399
      %v1510 = vpop.f32.mrb[0].mxu0
      %v1511 = vadd.f32 0.0, %v1510
      %v1512 = vpop.f32.mrb[0].mxu0
      %v1513 = vpop.f32.mrb[0].mxu0
      %v1514 = vadd.f32 0.0, %v1513
      %v1515 = vpop.f32.mrb[0].mxu0
      %1516 = vdwg.mxu0
      %v1517 = vadd.f32 %v1307, %v1487
      %v1518 = vadd.f32 %v1308, %v1490
      %v1519 = vadd.f32 %v1309, %v1495
      %v1520 = vadd.f32 %v1310, %v1498
      %v1521 = vadd.f32 %v1311, %v1503
      %v1522 = vadd.f32 %v1312, %v1506
      %v1523 = vadd.f32 %v1313, %v1511
      %v1524 = vadd.f32 %v1314, %v1514
      %s1525 = scalar_lea.vmem %s207, 16
      %v1526 = vld [vmem:[%s1525] sm:$0xf]
      %v1527 = vld [vmem:[%s1525 + $0x8] sm:$0xf]
      %v1528 = vld [vmem:[%s1525 + $0x10] sm:$0xf]
      %v1529 = vld [vmem:[%s1525 + $0x18] sm:$0xf]
      %v1530 = vld [vmem:[%s1525 + $0x20] sm:$0xf]
      %v1531 = vld [vmem:[%s1525 + $0x28] sm:$0xf]
      %v1532 = vld [vmem:[%s1525 + $0x30] sm:$0xf]
      %v1533 = vld [vmem:[%s1525 + $0x38] sm:$0xf]
      %s1534 = scalar_lea.vmem %s1, 384
      %v1535 = vld [vmem:[%s1534] sm:$0xf]
      %v1536 = vld [vmem:[%s1534 + $0x4] sm:$0xf]
      %v1537 = vld [vmem:[%s1534 + $0x8] sm:$0xf]
      %v1538 = vld [vmem:[%s1534 + $0xc] sm:$0xf]
      %v1539 = vld [vmem:[%s1534 + $0x10] sm:$0xf]
      %v1540 = vld [vmem:[%s1534 + $0x14] sm:$0xf]
      %v1541 = vld [vmem:[%s1534 + $0x18] sm:$0xf]
      %v1542 = vld [vmem:[%s1534 + $0x1c] sm:$0xf]
      %v1543 = vld [vmem:[%s1534 + $0x20] sm:$0xf]
      %v1544 = vld [vmem:[%s1534 + $0x24] sm:$0xf]
      %v1545 = vld [vmem:[%s1534 + $0x28] sm:$0xf]
      %v1546 = vld [vmem:[%s1534 + $0x2c] sm:$0xf]
      %v1547 = vld [vmem:[%s1534 + $0x30] sm:$0xf]
      %v1548 = vld [vmem:[%s1534 + $0x34] sm:$0xf]
      %v1549 = vld [vmem:[%s1534 + $0x38] sm:$0xf]
      %v1550 = vld [vmem:[%s1534 + $0x3c] sm:$0xf]
      %v1559 = vunpack.c.l.b16 %v1526
      %v1560 = vunpack.c.l.b16 %v1527
      %v1561 = vunpack.c.l.b16 %v1528
      %v1562 = vunpack.c.l.b16 %v1529
      %v1563 = vunpack.c.l.b16 %v1530
      %v1564 = vunpack.c.l.b16 %v1531
      %v1565 = vunpack.c.l.b16 %v1532
      %v1566 = vunpack.c.l.b16 %v1533
      %v1567 = vpack.c.b16 %v1560, %v1559
      %v1568 = vpack.c.b16 %v1562, %v1561
      %v1569 = vpack.c.b16 %v1564, %v1563
      %v1570 = vpack.c.b16 %v1566, %v1565
      %v1591 = vunpack.c.l.b16 %v1535
      %v1592 = vunpack.c.l.b16 %v1536
      %v1593 = vunpack.c.l.b16 %v1537
      %v1594 = vunpack.c.l.b16 %v1538
      %v1595 = vunpack.c.l.b16 %v1539
      %v1596 = vunpack.c.l.b16 %v1540
      %v1597 = vunpack.c.l.b16 %v1541
      %v1598 = vunpack.c.l.b16 %v1542
      %v1599 = vunpack.c.l.b16 %v1543
      %v1600 = vunpack.c.l.b16 %v1544
      %v1601 = vunpack.c.l.b16 %v1545
      %v1602 = vunpack.c.l.b16 %v1546
      %v1603 = vunpack.c.l.b16 %v1547
      %v1604 = vunpack.c.l.b16 %v1548
      %v1605 = vunpack.c.l.b16 %v1549
      %v1606 = vunpack.c.l.b16 %v1550
      %v1607 = vpack.c.b16 %v1592, %v1591
      %v1608 = vpack.c.b16 %v1594, %v1593
      %v1609 = vpack.c.b16 %v1596, %v1595
      %v1610 = vpack.c.b16 %v1598, %v1597
      %v1611 = vpack.c.b16 %v1600, %v1599
      %v1612 = vpack.c.b16 %v1602, %v1601
      %v1613 = vpack.c.b16 %v1604, %v1603
      %v1614 = vpack.c.b16 %v1606, %v1605
      %1623 = vmatprep.subr.bf16.mxu0 0
      %1624 = vmatpush1.bf16.msra.mxu0 %v1607
      %1625 = vmatprep.subr.bf16.mxu0 0
      %1626 = vmatpush1.bf16.msra.mxu0 %v1608
      %1627 = vmatprep.subr.bf16.mxu0 0
      %1628 = vmatpush1.bf16.msra.mxu0 %v1609
      %1629 = vmatprep.subr.bf16.mxu0 0
      %1630 = vmatpush1.bf16.msra.mxu0 %v1610
      %1631 = vmatprep.subr.bf16.mxu0 0
      %1632 = vmatpush1.bf16.msra.mxu0 %v1611
      %1633 = vmatprep.subr.bf16.mxu0 0
      %1634 = vmatpush1.bf16.msra.mxu0 %v1612
      %1635 = vmatprep.subr.bf16.mxu0 0
      %1636 = vmatpush1.bf16.msra.mxu0 %v1613
      %1637 = vmatprep.subr.bf16.mxu0 0
      %1638 = vmatpush1.bf16.msra.mxu0 %v1614
      %1639 = vmatprep.subr.bf16.mxu0 0
      %1640 = vmatpush1.bf16.msra.mxu0 0
      %1641 = vmatprep.subr.bf16.mxu0 0
      %1642 = vmatpush1.bf16.msra.mxu0 0
      %1643 = vmatprep.subr.bf16.mxu0 0
      %1644 = vmatpush1.bf16.msra.mxu0 0
      %1645 = vmatprep.subr.bf16.mxu0 0
      %1646 = vmatpush1.bf16.msra.mxu0 0
      %1647 = vmatprep.subr.bf16.mxu0 0
      %1648 = vmatpush1.bf16.msra.mxu0 0
      %1649 = vmatprep.subr.bf16.mxu0 0
      %1650 = vmatpush1.bf16.msra.mxu0 0
      %1651 = vmatprep.subr.bf16.mxu0 0
      %1652 = vmatpush1.bf16.msra.mxu0 0
      %1653 = vmatprep.subr.bf16.mxu0 0
      %1654 = vmatpush1.bf16.msra.mxu0 0
      %1655 = vmatprep.mubr.bf16.mxu0 0
      %1656 = vmatmul.mubr.bf16.gmra.mrb[0].mxu0 %v1567
      %v1657 = vpop.f32.mrb[0].mxu0
      %v1658 = vadd.f32 0.0, %v1657
      %v1659 = vpop.f32.mrb[0].mxu0
      %v1660 = vpop.f32.mrb[0].mxu0
      %v1661 = vadd.f32 0.0, %v1660
      %v1662 = vpop.f32.mrb[0].mxu0
      %1663 = vmatprep.mubr.bf16.mxu0 0
      %1664 = vmatmul.mubr.bf16.gmra.mrb[0].mxu0 %v1568
      %v1665 = vpop.f32.mrb[0].mxu0
      %v1666 = vadd.f32 0.0, %v1665
      %v1667 = vpop.f32.mrb[0].mxu0
      %v1668 = vpop.f32.mrb[0].mxu0
      %v1669 = vadd.f32 0.0, %v1668
      %v1670 = vpop.f32.mrb[0].mxu0
      %1671 = vmatprep.mubr.bf16.mxu0 0
      %1672 = vmatmul.mubr.bf16.gmra.mrb[0].mxu0 %v1569
      %v1673 = vpop.f32.mrb[0].mxu0
      %v1674 = vadd.f32 0.0, %v1673
      %v1675 = vpop.f32.mrb[0].mxu0
      %v1676 = vpop.f32.mrb[0].mxu0
      %v1677 = vadd.f32 0.0, %v1676
      %v1678 = vpop.f32.mrb[0].mxu0
      %1679 = vmatprep.mubr.bf16.mxu0 0
      %1680 = vmatmul.mubr.bf16.gmra.mrb[0].mxu0 %v1570
      %v1681 = vpop.f32.mrb[0].mxu0
      %v1682 = vadd.f32 0.0, %v1681
      %v1683 = vpop.f32.mrb[0].mxu0
      %v1684 = vpop.f32.mrb[0].mxu0
      %v1685 = vadd.f32 0.0, %v1684
      %v1686 = vpop.f32.mrb[0].mxu0
      %1687 = vdwg.mxu0
      %v1688 = vadd.f32 %v1517, %v1658
      %v1689 = vadd.f32 %v1518, %v1661
      %v1690 = vadd.f32 %v1519, %v1666
      %v1691 = vadd.f32 %v1520, %v1669
      %v1692 = vadd.f32 %v1521, %v1674
      %v1693 = vadd.f32 %v1522, %v1677
      %v1694 = vadd.f32 %v1523, %v1682
      %v1695 = vadd.f32 %v1524, %v1685
      %v1696 = vld [vmem:[%s1525] sm:$0xf]
      %v1697 = vld [vmem:[%s1525 + $0x4] sm:$0x1]
      %v1698 = vld [vmem:[%s1525 + $0x8] sm:$0xf]
      %v1699 = vld [vmem:[%s1525 + $0xc] sm:$0x1]
      %v1700 = vld [vmem:[%s1525 + $0x10] sm:$0xf]
      %v1701 = vld [vmem:[%s1525 + $0x14] sm:$0x1]
      %v1702 = vld [vmem:[%s1525 + $0x18] sm:$0xf]
      %v1703 = vld [vmem:[%s1525 + $0x1c] sm:$0x1]
      %v1704 = vld [vmem:[%s1525 + $0x20] sm:$0xf]
      %v1705 = vld [vmem:[%s1525 + $0x24] sm:$0x1]
      %v1706 = vld [vmem:[%s1525 + $0x28] sm:$0xf]
      %v1707 = vld [vmem:[%s1525 + $0x2c] sm:$0x1]
      %v1708 = vld [vmem:[%s1525 + $0x30] sm:$0xf]
      %v1709 = vld [vmem:[%s1525 + $0x34] sm:$0x1]
      %v1710 = vld [vmem:[%s1525 + $0x38] sm:$0xf]
      %v1711 = vld [vmem:[%s1525 + $0x3c] sm:$0x1]
      %v1713 = vshrl.u32 %v1696, 16
      %v1715 = vrot.slane %v1713, 4
      %v1716 = vshll.u32 %v1696, 16
      %v1718 = vrot.slane %v1716, 5
      %v1719 = vor.u32 %v1715, %v1718
      %v1720 = vrot.slane %v1719, 4
      %v1722 = vshll.u32 %v1697, 16
      %v1724 = vrot.slane %v1722, 5
      %v1725 = vsel %vm253, %v1720, %v1724
      %v1727 = vshrl.u32 %v1698, 16
      %v1729 = vrot.slane %v1727, 4
      %v1730 = vshll.u32 %v1698, 16
      %v1732 = vrot.slane %v1730, 5
      %v1733 = vor.u32 %v1729, %v1732
      %v1734 = vrot.slane %v1733, 4
      %v1736 = vshll.u32 %v1699, 16
      %v1738 = vrot.slane %v1736, 5
      %v1739 = vsel %vm253, %v1734, %v1738
      %v1741 = vshrl.u32 %v1700, 16
      %v1743 = vrot.slane %v1741, 4
      %v1744 = vshll.u32 %v1700, 16
      %v1746 = vrot.slane %v1744, 5
      %v1747 = vor.u32 %v1743, %v1746
      %v1748 = vrot.slane %v1747, 4
      %v1750 = vshll.u32 %v1701, 16
      %v1752 = vrot.slane %v1750, 5
      %v1753 = vsel %vm253, %v1748, %v1752
      %v1755 = vshrl.u32 %v1702, 16
      %v1757 = vrot.slane %v1755, 4
      %v1758 = vshll.u32 %v1702, 16
      %v1760 = vrot.slane %v1758, 5
      %v1761 = vor.u32 %v1757, %v1760
      %v1762 = vrot.slane %v1761, 4
      %v1764 = vshll.u32 %v1703, 16
      %v1766 = vrot.slane %v1764, 5
      %v1767 = vsel %vm253, %v1762, %v1766
      %v1769 = vshrl.u32 %v1704, 16
      %v1771 = vrot.slane %v1769, 4
      %v1772 = vshll.u32 %v1704, 16
      %v1774 = vrot.slane %v1772, 5
      %v1775 = vor.u32 %v1771, %v1774
      %v1776 = vrot.slane %v1775, 4
      %v1778 = vshll.u32 %v1705, 16
      %v1780 = vrot.slane %v1778, 5
      %v1781 = vsel %vm253, %v1776, %v1780
      %v1783 = vshrl.u32 %v1706, 16
      %v1785 = vrot.slane %v1783, 4
      %v1786 = vshll.u32 %v1706, 16
      %v1788 = vrot.slane %v1786, 5
      %v1789 = vor.u32 %v1785, %v1788
      %v1790 = vrot.slane %v1789, 4
      %v1792 = vshll.u32 %v1707, 16
      %v1794 = vrot.slane %v1792, 5
      %v1795 = vsel %vm253, %v1790, %v1794
      %v1797 = vshrl.u32 %v1708, 16
      %v1799 = vrot.slane %v1797, 4
      %v1800 = vshll.u32 %v1708, 16
      %v1802 = vrot.slane %v1800, 5
      %v1803 = vor.u32 %v1799, %v1802
      %v1804 = vrot.slane %v1803, 4
      %v1806 = vshll.u32 %v1709, 16
      %v1808 = vrot.slane %v1806, 5
      %v1809 = vsel %vm253, %v1804, %v1808
      %v1811 = vshrl.u32 %v1710, 16
      %v1813 = vrot.slane %v1811, 4
      %v1814 = vshll.u32 %v1710, 16
      %v1816 = vrot.slane %v1814, 5
      %v1817 = vor.u32 %v1813, %v1816
      %v1818 = vrot.slane %v1817, 4
      %v1820 = vshll.u32 %v1711, 16
      %v1822 = vrot.slane %v1820, 5
      %v1823 = vsel %vm253, %v1818, %v1822
      %s1824 = scalar_lea.vmem %s1, 448
      %v1825 = vld [vmem:[%s1824] sm:$0xf]
      %v1826 = vld [vmem:[%s1824 + $0x4] sm:$0xf]
      %v1827 = vld [vmem:[%s1824 + $0x8] sm:$0xf]
      %v1828 = vld [vmem:[%s1824 + $0xc] sm:$0xf]
      %v1829 = vld [vmem:[%s1824 + $0x10] sm:$0xf]
      %v1830 = vld [vmem:[%s1824 + $0x14] sm:$0xf]
      %v1831 = vld [vmem:[%s1824 + $0x18] sm:$0xf]
      %v1832 = vld [vmem:[%s1824 + $0x1c] sm:$0xf]
      %v1833 = vld [vmem:[%s1824 + $0x20] sm:$0xf]
      %v1834 = vld [vmem:[%s1824 + $0x24] sm:$0xf]
      %v1835 = vld [vmem:[%s1824 + $0x28] sm:$0xf]
      %v1836 = vld [vmem:[%s1824 + $0x2c] sm:$0xf]
      %v1837 = vld [vmem:[%s1824 + $0x30] sm:$0xf]
      %v1838 = vld [vmem:[%s1824 + $0x34] sm:$0xf]
      %v1839 = vld [vmem:[%s1824 + $0x38] sm:$0xf]
      %v1840 = vld [vmem:[%s1824 + $0x3c] sm:$0xf]
      %v1841 = vunpack.c.l.b16 %v1725
      %v1842 = vunpack.c.l.b16 %v1739
      %v1843 = vunpack.c.l.b16 %v1753
      %v1844 = vunpack.c.l.b16 %v1767
      %v1845 = vunpack.c.l.b16 %v1781
      %v1846 = vunpack.c.l.b16 %v1795
      %v1847 = vunpack.c.l.b16 %v1809
      %v1848 = vunpack.c.l.b16 %v1823
      %v1849 = vpack.c.b16 %v1842, %v1841
      %v1850 = vpack.c.b16 %v1844, %v1843
      %v1851 = vpack.c.b16 %v1846, %v1845
      %v1852 = vpack.c.b16 %v1848, %v1847
      %v1873 = vunpack.c.l.b16 %v1825
      %v1874 = vunpack.c.l.b16 %v1826
      %v1875 = vunpack.c.l.b16 %v1827
      %v1876 = vunpack.c.l.b16 %v1828
      %v1877 = vunpack.c.l.b16 %v1829
      %v1878 = vunpack.c.l.b16 %v1830
      %v1879 = vunpack.c.l.b16 %v1831
      %v1880 = vunpack.c.l.b16 %v1832
      %v1881 = vunpack.c.l.b16 %v1833
      %v1882 = vunpack.c.l.b16 %v1834
      %v1883 = vunpack.c.l.b16 %v1835
      %v1884 = vunpack.c.l.b16 %v1836
      %v1885 = vunpack.c.l.b16 %v1837
      %v1886 = vunpack.c.l.b16 %v1838
      %v1887 = vunpack.c.l.b16 %v1839
      %v1888 = vunpack.c.l.b16 %v1840
      %v1889 = vpack.c.b16 %v1874, %v1873
      %v1890 = vpack.c.b16 %v1876, %v1875
      %v1891 = vpack.c.b16 %v1878, %v1877
      %v1892 = vpack.c.b16 %v1880, %v1879
      %v1893 = vpack.c.b16 %v1882, %v1881
      %v1894 = vpack.c.b16 %v1884, %v1883
      %v1895 = vpack.c.b16 %v1886, %v1885
      %v1896 = vpack.c.b16 %v1888, %v1887
      %1905 = vmatprep.subr.bf16.mxu0 0
      %1906 = vmatpush1.bf16.msra.mxu0 %v1889
      %1907 = vmatprep.subr.bf16.mxu0 0
      %1908 = vmatpush1.bf16.msra.mxu0 %v1890
      %1909 = vmatprep.subr.bf16.mxu0 0
      %1910 = vmatpush1.bf16.msra.mxu0 %v1891
      %1911 = vmatprep.subr.bf16.mxu0 0
      %1912 = vmatpush1.bf16.msra.mxu0 %v1892
      %1913 = vmatprep.subr.bf16.mxu0 0
      %1914 = vmatpush1.bf16.msra.mxu0 %v1893
      %1915 = vmatprep.subr.bf16.mxu0 0
      %1916 = vmatpush1.bf16.msra.mxu0 %v1894
      %1917 = vmatprep.subr.bf16.mxu0 0
      %1918 = vmatpush1.bf16.msra.mxu0 %v1895
      %1919 = vmatprep.subr.bf16.mxu0 0
      %1920 = vmatpush1.bf16.msra.mxu0 %v1896
      %1921 = vmatprep.subr.bf16.mxu0 0
      %1922 = vmatpush1.bf16.msra.mxu0 0
      %1923 = vmatprep.subr.bf16.mxu0 0
      %1924 = vmatpush1.bf16.msra.mxu0 0
      %1925 = vmatprep.subr.bf16.mxu0 0
      %1926 = vmatpush1.bf16.msra.mxu0 0
      %1927 = vmatprep.subr.bf16.mxu0 0
      %1928 = vmatpush1.bf16.msra.mxu0 0
      %1929 = vmatprep.subr.bf16.mxu0 0
      %1930 = vmatpush1.bf16.msra.mxu0 0
      %1931 = vmatprep.subr.bf16.mxu0 0
      %1932 = vmatpush1.bf16.msra.mxu0 0
      %1933 = vmatprep.subr.bf16.mxu0 0
      %1934 = vmatpush1.bf16.msra.mxu0 0
      %1935 = vmatprep.subr.bf16.mxu0 0
      %1936 = vmatpush1.bf16.msra.mxu0 0
      %1937 = vmatprep.mubr.bf16.mxu0 0
      %1938 = vmatmul.mubr.bf16.gmra.mrb[0].mxu0 %v1849
      %v1939 = vpop.f32.mrb[0].mxu0
      %v1940 = vadd.f32 0.0, %v1939
      %v1941 = vpop.f32.mrb[0].mxu0
      %v1942 = vpop.f32.mrb[0].mxu0
      %v1943 = vadd.f32 0.0, %v1942
      %v1944 = vpop.f32.mrb[0].mxu0
      %1945 = vmatprep.mubr.bf16.mxu0 0
      %1946 = vmatmul.mubr.bf16.gmra.mrb[0].mxu0 %v1850
      %v1947 = vpop.f32.mrb[0].mxu0
      %v1948 = vadd.f32 0.0, %v1947
      %v1949 = vpop.f32.mrb[0].mxu0
      %v1950 = vpop.f32.mrb[0].mxu0
      %v1951 = vadd.f32 0.0, %v1950
      %v1952 = vpop.f32.mrb[0].mxu0
      %1953 = vmatprep.mubr.bf16.mxu0 0
      %1954 = vmatmul.mubr.bf16.gmra.mrb[0].mxu0 %v1851
      %v1955 = vpop.f32.mrb[0].mxu0
      %v1956 = vadd.f32 0.0, %v1955
      %v1957 = vpop.f32.mrb[0].mxu0
      %v1958 = vpop.f32.mrb[0].mxu0
      %v1959 = vadd.f32 0.0, %v1958
      %v1960 = vpop.f32.mrb[0].mxu0
      %1961 = vmatprep.mubr.bf16.mxu0 0
      %1962 = vmatmul.mubr.bf16.gmra.mrb[0].mxu0 %v1852
      %v1963 = vpop.f32.mrb[0].mxu0
      %v1964 = vadd.f32 0.0, %v1963
      %v1965 = vpop.f32.mrb[0].mxu0
      %v1966 = vpop.f32.mrb[0].mxu0
      %v1967 = vadd.f32 0.0, %v1966
      %v1968 = vpop.f32.mrb[0].mxu0
      %1969 = vdwg.mxu0
      %v1970 = vadd.f32 %v1688, %v1940
      %v1971 = vadd.f32 %v1689, %v1943
      %v1972 = vadd.f32 %v1690, %v1948
      %v1973 = vadd.f32 %v1691, %v1951
      %v1974 = vadd.f32 %v1692, %v1956
      %v1975 = vadd.f32 %v1693, %v1959
      %v1976 = vadd.f32 %v1694, %v1964
      %v1977 = vadd.f32 %v1695, %v1967
      %v1978 = vld [vmem:[%s1525] sm:$0xe]
      %v1979 = vld [vmem:[%s1525 + $0x8] sm:$0xe]
      %v1980 = vld [vmem:[%s1525 + $0x10] sm:$0xe]
      %v1981 = vld [vmem:[%s1525 + $0x18] sm:$0xe]
      %v1982 = vld [vmem:[%s1525 + $0x20] sm:$0xe]
      %v1983 = vld [vmem:[%s1525 + $0x28] sm:$0xe]
      %v1984 = vld [vmem:[%s1525 + $0x30] sm:$0xe]
      %v1985 = vld [vmem:[%s1525 + $0x38] sm:$0xe]
      %v2002 = vrot.slane %v1978, 5
      %v2003 = vrot.slane %v2002, 4
      %v2004 = vrot.slane %v1697, 5
      %v2005 = vsel %vm675, %v2003, %v2004
      %v2006 = vrot.slane %v1979, 5
      %v2007 = vrot.slane %v2006, 4
      %v2008 = vrot.slane %v1699, 5
      %v2009 = vsel %vm675, %v2007, %v2008
      %v2010 = vrot.slane %v1980, 5
      %v2011 = vrot.slane %v2010, 4
      %v2012 = vrot.slane %v1701, 5
      %v2013 = vsel %vm675, %v2011, %v2012
      %v2014 = vrot.slane %v1981, 5
      %v2015 = vrot.slane %v2014, 4
      %v2016 = vrot.slane %v1703, 5
      %v2017 = vsel %vm675, %v2015, %v2016
      %v2018 = vrot.slane %v1982, 5
      %v2019 = vrot.slane %v2018, 4
      %v2020 = vrot.slane %v1705, 5
      %v2021 = vsel %vm675, %v2019, %v2020
      %v2022 = vrot.slane %v1983, 5
      %v2023 = vrot.slane %v2022, 4
      %v2024 = vrot.slane %v1707, 5
      %v2025 = vsel %vm675, %v2023, %v2024
      %v2026 = vrot.slane %v1984, 5
      %v2027 = vrot.slane %v2026, 4
      %v2028 = vrot.slane %v1709, 5
      %v2029 = vsel %vm675, %v2027, %v2028
      %v2030 = vrot.slane %v1985, 5
      %v2031 = vrot.slane %v2030, 4
      %v2032 = vrot.slane %v1711, 5
      %v2033 = vsel %vm675, %v2031, %v2032
      %s2034 = scalar_lea.vmem %s1, 512
      %v2035 = vld [vmem:[%s2034] sm:$0xf]
      %v2036 = vld [vmem:[%s2034 + $0x4] sm:$0xf]
      %v2037 = vld [vmem:[%s2034 + $0x8] sm:$0xf]
      %v2038 = vld [vmem:[%s2034 + $0xc] sm:$0xf]
      %v2039 = vld [vmem:[%s2034 + $0x10] sm:$0xf]
      %v2040 = vld [vmem:[%s2034 + $0x14] sm:$0xf]
      %v2041 = vld [vmem:[%s2034 + $0x18] sm:$0xf]
      %v2042 = vld [vmem:[%s2034 + $0x1c] sm:$0xf]
      %v2043 = vld [vmem:[%s2034 + $0x20] sm:$0xf]
      %v2044 = vld [vmem:[%s2034 + $0x24] sm:$0xf]
      %v2045 = vld [vmem:[%s2034 + $0x28] sm:$0xf]
      %v2046 = vld [vmem:[%s2034 + $0x2c] sm:$0xf]
      %v2047 = vld [vmem:[%s2034 + $0x30] sm:$0xf]
      %v2048 = vld [vmem:[%s2034 + $0x34] sm:$0xf]
      %v2049 = vld [vmem:[%s2034 + $0x38] sm:$0xf]
      %v2050 = vld [vmem:[%s2034 + $0x3c] sm:$0xf]
      %v2051 = vunpack.c.l.b16 %v2005
      %v2052 = vunpack.c.l.b16 %v2009
      %v2053 = vunpack.c.l.b16 %v2013
      %v2054 = vunpack.c.l.b16 %v2017
      %v2055 = vunpack.c.l.b16 %v2021
      %v2056 = vunpack.c.l.b16 %v2025
      %v2057 = vunpack.c.l.b16 %v2029
      %v2058 = vunpack.c.l.b16 %v2033
      %v2059 = vpack.c.b16 %v2052, %v2051
      %v2060 = vpack.c.b16 %v2054, %v2053
      %v2061 = vpack.c.b16 %v2056, %v2055
      %v2062 = vpack.c.b16 %v2058, %v2057
      %v2083 = vunpack.c.l.b16 %v2035
      %v2084 = vunpack.c.l.b16 %v2036
      %v2085 = vunpack.c.l.b16 %v2037
      %v2086 = vunpack.c.l.b16 %v2038
      %v2087 = vunpack.c.l.b16 %v2039
      %v2088 = vunpack.c.l.b16 %v2040
      %v2089 = vunpack.c.l.b16 %v2041
      %v2090 = vunpack.c.l.b16 %v2042
      %v2091 = vunpack.c.l.b16 %v2043
      %v2092 = vunpack.c.l.b16 %v2044
      %v2093 = vunpack.c.l.b16 %v2045
      %v2094 = vunpack.c.l.b16 %v2046
      %v2095 = vunpack.c.l.b16 %v2047
      %v2096 = vunpack.c.l.b16 %v2048
      %v2097 = vunpack.c.l.b16 %v2049
      %v2098 = vunpack.c.l.b16 %v2050
      %v2099 = vpack.c.b16 %v2084, %v2083
      %v2100 = vpack.c.b16 %v2086, %v2085
      %v2101 = vpack.c.b16 %v2088, %v2087
      %v2102 = vpack.c.b16 %v2090, %v2089
      %v2103 = vpack.c.b16 %v2092, %v2091
      %v2104 = vpack.c.b16 %v2094, %v2093
      %v2105 = vpack.c.b16 %v2096, %v2095
      %v2106 = vpack.c.b16 %v2098, %v2097
      %2115 = vmatprep.subr.bf16.mxu0 0
      %2116 = vmatpush1.bf16.msra.mxu0 %v2099
      %2117 = vmatprep.subr.bf16.mxu0 0
      %2118 = vmatpush1.bf16.msra.mxu0 %v2100
      %2119 = vmatprep.subr.bf16.mxu0 0
      %2120 = vmatpush1.bf16.msra.mxu0 %v2101
      %2121 = vmatprep.subr.bf16.mxu0 0
      %2122 = vmatpush1.bf16.msra.mxu0 %v2102
      %2123 = vmatprep.subr.bf16.mxu0 0
      %2124 = vmatpush1.bf16.msra.mxu0 %v2103
      %2125 = vmatprep.subr.bf16.mxu0 0
      %2126 = vmatpush1.bf16.msra.mxu0 %v2104
      %2127 = vmatprep.subr.bf16.mxu0 0
      %2128 = vmatpush1.bf16.msra.mxu0 %v2105
      %2129 = vmatprep.subr.bf16.mxu0 0
      %2130 = vmatpush1.bf16.msra.mxu0 %v2106
      %2131 = vmatprep.subr.bf16.mxu0 0
      %2132 = vmatpush1.bf16.msra.mxu0 0
      %2133 = vmatprep.subr.bf16.mxu0 0
      %2134 = vmatpush1.bf16.msra.mxu0 0
      %2135 = vmatprep.subr.bf16.mxu0 0
      %2136 = vmatpush1.bf16.msra.mxu0 0
      %2137 = vmatprep.subr.bf16.mxu0 0
      %2138 = vmatpush1.bf16.msra.mxu0 0
      %2139 = vmatprep.subr.bf16.mxu0 0
      %2140 = vmatpush1.bf16.msra.mxu0 0
      %2141 = vmatprep.subr.bf16.mxu0 0
      %2142 = vmatpush1.bf16.msra.mxu0 0
      %2143 = vmatprep.subr.bf16.mxu0 0
      %2144 = vmatpush1.bf16.msra.mxu0 0
      %2145 = vmatprep.subr.bf16.mxu0 0
      %2146 = vmatpush1.bf16.msra.mxu0 0
      %2147 = vmatprep.mubr.bf16.mxu0 0
      %2148 = vmatmul.mubr.bf16.gmra.mrb[0].mxu0 %v2059
      %v2149 = vpop.f32.mrb[0].mxu0
      %v2150 = vadd.f32 0.0, %v2149
      %v2151 = vpop.f32.mrb[0].mxu0
      %v2152 = vpop.f32.mrb[0].mxu0
      %v2153 = vadd.f32 0.0, %v2152
      %v2154 = vpop.f32.mrb[0].mxu0
      %2155 = vmatprep.mubr.bf16.mxu0 0
      %2156 = vmatmul.mubr.bf16.gmra.mrb[0].mxu0 %v2060
      %v2157 = vpop.f32.mrb[0].mxu0
      %v2158 = vadd.f32 0.0, %v2157
      %v2159 = vpop.f32.mrb[0].mxu0
      %v2160 = vpop.f32.mrb[0].mxu0
      %v2161 = vadd.f32 0.0, %v2160
      %v2162 = vpop.f32.mrb[0].mxu0
      %2163 = vmatprep.mubr.bf16.mxu0 0
      %2164 = vmatmul.mubr.bf16.gmra.mrb[0].mxu0 %v2061
      %v2165 = vpop.f32.mrb[0].mxu0
      %v2166 = vadd.f32 0.0, %v2165
      %v2167 = vpop.f32.mrb[0].mxu0
      %v2168 = vpop.f32.mrb[0].mxu0
      %v2169 = vadd.f32 0.0, %v2168
      %v2170 = vpop.f32.mrb[0].mxu0
      %2171 = vmatprep.mubr.bf16.mxu0 0
      %2172 = vmatmul.mubr.bf16.gmra.mrb[0].mxu0 %v2062
      %v2173 = vpop.f32.mrb[0].mxu0
      %v2174 = vadd.f32 0.0, %v2173
      %v2175 = vpop.f32.mrb[0].mxu0
      %v2176 = vpop.f32.mrb[0].mxu0
      %v2177 = vadd.f32 0.0, %v2176
      %v2178 = vpop.f32.mrb[0].mxu0
      %2179 = vdwg.mxu0
      %v2180 = vadd.f32 %v1970, %v2150
      %v2181 = vadd.f32 %v1971, %v2153
      %v2182 = vadd.f32 %v1972, %v2158
      %v2183 = vadd.f32 %v1973, %v2161
      %v2184 = vadd.f32 %v1974, %v2166
      %v2185 = vadd.f32 %v1975, %v2169
      %v2186 = vadd.f32 %v1976, %v2174
      %v2187 = vadd.f32 %v1977, %v2177
      %v2188 = vld [vmem:[%s2] sm:$0x1]
      %v2190 = vlaneseq
      %v2191 = vshrl.u32 %v2190, 7
      %v2192 = vsub.s32 0, %v2191
      %v2193 = vrot.slane %v2188, %v2192
      %v2195 = vadd.f32 %v2180, %v2193
      %v2196 = vadd.f32 %v2181, %v2193
      %v2197 = vadd.f32 %v2182, %v2193
      %v2198 = vadd.f32 %v2183, %v2193
      %v2199 = vadd.f32 %v2184, %v2193
      %v2200 = vadd.f32 %v2185, %v2193
      %v2201 = vadd.f32 %v2186, %v2193
      %v2202 = vadd.f32 %v2187, %v2193
      %v2203 = vld [vmem:[%s212] sm:$0xff]
      %v2204 = vld [vmem:[%s212 + $0x8] sm:$0xff]
      %v2205 = vld [vmem:[%s212 + $0x10] sm:$0xff]
      %v2206 = vld [vmem:[%s212 + $0x18] sm:$0xff]
      %v2207 = vld [vmem:[%s212 + $0x20] sm:$0xff]
      %v2208 = vld [vmem:[%s212 + $0x28] sm:$0xff]
      %v2209 = vld [vmem:[%s212 + $0x30] sm:$0xff]
      %v2210 = vld [vmem:[%s212 + $0x38] sm:$0xff]
      %v2211 = vadd.f32 %v2195, %v2203
      %v2212 = vadd.f32 %v2196, %v2204
      %v2213 = vadd.f32 %v2197, %v2205
      %v2214 = vadd.f32 %v2198, %v2206
      %v2215 = vadd.f32 %v2199, %v2207
      %v2216 = vadd.f32 %v2200, %v2208
      %v2217 = vadd.f32 %v2201, %v2209
      %v2218 = vadd.f32 %v2202, %v2210
      %v2219 = vmax.f32 %v2211, 0.0
      %v2220 = vmax.f32 %v2212, 0.0
      %v2221 = vmax.f32 %v2213, 0.0
      %v2222 = vmax.f32 %v2214, 0.0
      %v2223 = vmax.f32 %v2215, 0.0
      %v2224 = vmax.f32 %v2216, 0.0
      %v2225 = vmax.f32 %v2217, 0.0
      %v2226 = vmax.f32 %v2218, 0.0
      %v2227 = vpack.c.bf16 %v2219, %v2219
      %v2228 = vpack.c.bf16 %v2220, %v2220
      %v2229 = vpack.c.bf16 %v2221, %v2221
      %v2230 = vpack.c.bf16 %v2222, %v2222
      %v2231 = vpack.c.bf16 %v2223, %v2223
      %v2232 = vpack.c.bf16 %v2224, %v2224
      %v2233 = vpack.c.bf16 %v2225, %v2225
      %v2234 = vpack.c.bf16 %v2226, %v2226
      %2235 = vst [vmem:[%s217] sm:$0xf] %v2227
      %2236 = vst [vmem:[%s217 + $0x4] sm:$0xf] %v2228
      %2237 = vst [vmem:[%s217 + $0x8] sm:$0xf] %v2229
      %2238 = vst [vmem:[%s217 + $0xc] sm:$0xf] %v2230
      %2239 = vst [vmem:[%s217 + $0x10] sm:$0xf] %v2231
      %2240 = vst [vmem:[%s217 + $0x14] sm:$0xf] %v2232
      %2241 = vst [vmem:[%s217 + $0x18] sm:$0xf] %v2233
      %2242 = vst [vmem:[%s217 + $0x1c] sm:$0xf] %v2234
      %p2243 = scmp.lt.s32.totalorder %s15, 1
      %s2244 = scalar_select %p2243, %s15, 1
      %s2245 = smul.addr %s2244, 8
      %s2246 = smul.addr %s2245, 4
      %s2247 = scalar_lea.vmem %s4, %s2246
      // Predicated region
      $region37: #{residual_block_forward.3} parent=35 // pred_check
        %p2248 = pneg %p127
      $region38: #{residual_block_forward.3} parent=35 // pred_check_branch
        %2250 = sbr.rel (%p2248) target = $region40
      $region39: #{residual_block_forward.3} parent=35 // pred_region
        _
      $region40: #{residual_block_forward.3} parent=35 // pred_fallthru
        _
    $region36: #{residual_block_forward.3} parent=5 // pred_fallthru
      _
    %p2251 = scmp.le.s32.totalorder 2, %s10
    // Predicated region
    $region41: #{residual_block_forward.3} parent=5 // pred_check
      %p2252 = pneg %p2251
    $region42: #{residual_block_forward.3} parent=5 // pred_check_branch
      %2254 = sbr.rel (%p2252) target = $region44
    $region43: #{residual_block_forward.3} parent=5 // pred_region
      %s2255 = ssub.s32 %s10, 2
      // Predicated region
      $region45: #{residual_block_forward.3} parent=43 // pred_check
        %p2256 = pneg %p133
      $region46: #{residual_block_forward.3} parent=43 // pred_check_branch
        %2258 = sbr.rel (%p2256) target = $region48
      $region47: #{residual_block_forward.3} parent=43 // pred_region
        %p2259 = scmp.lt.s32.totalorder %s16, 1
        %s2260 = scalar_select %p2259, %s16, 1
        %s2261 = smul.addr %s2260, 8
        %s2262 = smul.addr %s2261, 4
        %s2263 = scalar_lea.vmem %s4, %s2262
      $region48: #{residual_block_forward.3} parent=43 // pred_fallthru
        _
    $region44: #{residual_block_forward.3} parent=5 // pred_fallthru
      _
  $region6: #{residual_block_forward.3} parent=0 // loop_footer
    %s14 = sadd.s32 1, %s10
  $region7: #{residual_block_forward.3} parent=0 // loop_footer_branch
    %9 = sbr.rel target = $region3
  $region8: #{residual_block_forward.3} parent=0 // loop_exit
    _

</llo_original>
